<compile_context>
chip_gen: v7x
topology: tpu7x:2x2x1
jax: 0.10.0
libtpu: 0.0.40
codegen_flags: <defaults>
</compile_context>

<pallas_src>
import functools
import math

import jax
import jax.numpy as jnp
from jax.experimental import pallas as pl
from jax.experimental.pallas import tpu as pltpu


# ---------------------------------------------------------------------------
# Kernel 1: GroupNorm + fused QKV projection (per batch element)
# ---------------------------------------------------------------------------
def _norm_qkv_kernel(x_ref, gnw_ref, gnb_ref, m_ref, mt_ref, wqkv_ref,
                     q_ref, k_ref, v_ref, *, eps, group_size, scale):
    x = x_ref[0].astype(jnp.float32)                  # (S, C)
    S, C = x.shape

    # ---- GroupNorm (biased variance, matching PyTorch) ----
    # Per-channel sums run on the VPU/XLU; the tiny channel<->group reductions use
    # precomputed one-hot M (C,G) and M.T (G,C) passed from the host (no in-kernel transpose,
    # no lane-crossing reshape).
    denom = jnp.float32(S * group_size)
    col_sum = jnp.sum(x, axis=0, keepdims=True)       # (1, C)
    col_sq = jnp.sum(x * x, axis=0, keepdims=True)    # (1, C)
    g_mean = jnp.dot(col_sum, m_ref[...], preferred_element_type=jnp.float32) / denom   # (1, G)
    g_sq = jnp.dot(col_sq, m_ref[...], preferred_element_type=jnp.float32) / denom      # (1, G)
    g_var = g_sq - g_mean * g_mean
    mean_c = jnp.dot(g_mean, mt_ref[...], preferred_element_type=jnp.float32)           # (1, C)
    var_c = jnp.dot(g_var, mt_ref[...], preferred_element_type=jnp.float32)             # (1, C)
    xn = (x - mean_c) * jax.lax.rsqrt(var_c + eps)
    xn = xn * gnw_ref[...] + gnb_ref[...]             # affine (f32)

    # ---- fused QKV projection: one (S,C)x(C,3C) bf16 matmul, f32 accumulation ----
    qkv = jnp.dot(xn.astype(jnp.bfloat16), wqkv_ref[...],
                  preferred_element_type=jnp.float32)  # (S, 3C)
    # Fold the 1/sqrt(C) softmax scale into q once (so the attention kernel never rescales).
    q_ref[0] = (qkv[:, :C] * scale).astype(q_ref.dtype)
    k_ref[0] = qkv[:, C:2 * C].astype(k_ref.dtype)
    v_ref[0] = qkv[:, 2 * C:].astype(v_ref.dtype)


# ---------------------------------------------------------------------------
# Kernel 2: query/key tiled attention (online softmax) + output proj + residual
# ---------------------------------------------------------------------------
def _flash_attn_kernel(q_ref, k_ref, v_ref, x_ref, wo_ref, bo_ref, o_ref,
                       m_sc, l_sc, acc_sc, *, n_head):
    ki = pl.program_id(2)

    @pl.when(ki == 0)
    def _init():
        m_sc[...] = jnp.full(m_sc.shape, -jnp.inf, jnp.float32)
        l_sc[...] = jnp.zeros(l_sc.shape, jnp.float32)
        acc_sc[...] = jnp.zeros(acc_sc.shape, jnp.float32)

    q = q_ref[0]                                      # (TQ, C) bf16, pre-scaled by 1/sqrt(C)
    k = k_ref[0]                                      # (TK, C) bf16
    v = v_ref[0]                                      # (TK, C) bf16
    C = q.shape[-1]
    hd = C // n_head

    for h in range(n_head):                            # small, statically unrolled head loop
        qh = q[:, h * hd:(h + 1) * hd]
        kh = k[:, h * hd:(h + 1) * hd]
        vh = v[:, h * hd:(h + 1) * hd]
        # QK^T without an explicit transpose: contract the last dims of both operands on the MXU.
        s = jax.lax.dot_general(qh, kh, (((1,), (1,)), ((), ())),
                                preferred_element_type=jnp.float32)     # (TQ, TK)
        m_prev = m_sc[h]                              # (TQ, 1)
        m_new = jnp.maximum(m_prev, jnp.max(s, axis=-1, keepdims=True))
        alpha = jnp.exp(m_prev - m_new)               # EUP
        p = jnp.exp(s - m_new)                        # unnormalized; divide deferred to finalize
        l_sc[h] = alpha * l_sc[h] + jnp.sum(p, axis=-1, keepdims=True)
        acc_sc[h] = alpha * acc_sc[h] + jnp.dot(
            p.astype(jnp.bfloat16), vh, preferred_element_type=jnp.float32)
        m_sc[h] = m_new

    @pl.when(ki == pl.num_programs(2) - 1)
    def _finalize():
        # Per-head output projection fused in (no concat/relayout of head outputs),
        # softmax normalization as an EUP approx-reciprocal, plus bias and residual.
        y = x_ref[0].astype(jnp.float32) + bo_ref[...]
        for h in range(n_head):
            o_h = acc_sc[h] * pl.reciprocal(l_sc[h], approx=True)       # (TQ, hd)
            y = y + jnp.dot(o_h.astype(jnp.bfloat16),
                            wo_ref[h * hd:(h + 1) * hd, :],
                            preferred_element_type=jnp.float32)
        o_ref[0] = y.astype(o_ref.dtype)


def _pick_tile(s, target):
    if s <= target:
        return s
    for t in (target, 256, 128, 64, 32, 16, 8):
        if t <= target and s % t == 0:
            return t
    return s


def self_attention_pallas(x_nchw, params, *, n_head, norm_groups, eps=1e-5,
                          tq=128, tk=128):
    B, C, H, W = x_nchw.shape
    S = H * W
    hd = C // n_head
    G = norm_groups
    gs = C // G

    TQ = _pick_tile(S, tq)
    TK = _pick_tile(S, tk)

    # NCHW -> (B, S, C)
    # TODO(synk): these full-tensor transposes run in XLA; fold into a channels-last
    # model layout if they ever dominate the kernel time.
    x = jnp.transpose(x_nchw.reshape(B, C, S), (0, 2, 1))

    gn_w = params["gn_weight"].reshape(1, C).astype(jnp.float32)
    gn_b = params["gn_bias"].reshape(1, C).astype(jnp.float32)

    # qkv conv weight (3C, C, 1, 1); PyTorch chunks interleave per-head [q,k,v].
    wqkv = params["qkv_weight"].reshape(3 * C, C)
    w3 = wqkv.reshape(n_head, 3, hd, C)                        # (head, {q,k,v}, hd, C_in)
    wq = w3[:, 0].reshape(C, C)                                # (C_out head-major, C_in)
    wk = w3[:, 1].reshape(C, C)
    wv = w3[:, 2].reshape(C, C)
    w_fused = jnp.concatenate([wq, wk, wv], axis=0).T.astype(jnp.bfloat16)   # (C_in, 3C_out)

    wo = params["out_weight"].reshape(C, C).T.astype(jnp.bfloat16)           # (C_in, C_out)
    bo = params["out_bias"].reshape(1, C).astype(jnp.float32)

    # one-hot channel -> group masks (and its transpose, precomputed host-side)
    gmask = jnp.eye(G, dtype=jnp.float32)[jnp.arange(C) // gs]               # (C, G)
    gmask_t = gmask.T                                                        # (G, C)

    scale = 1.0 / math.sqrt(C)  # PyTorch divides by sqrt(channel), not head_dim (intentional)

    # ---- kernel 1: GroupNorm + fused QKV (bf16 q/k/v, scale folded into q) ----
    q, k, v = pl.pallas_call(
        functools.partial(_norm_qkv_kernel, eps=eps, group_size=gs, scale=scale),
        out_shape=(jax.ShapeDtypeStruct((B, S, C), jnp.bfloat16),
                   jax.ShapeDtypeStruct((B, S, C), jnp.bfloat16),
                   jax.ShapeDtypeStruct((B, S, C), jnp.bfloat16)),
        grid_spec=pltpu.PrefetchScalarGridSpec(
            num_scalar_prefetch=0,
            grid=(B,),
            in_specs=[
                pl.BlockSpec((1, S, C), lambda b: (b, 0, 0)),   # x
                pl.BlockSpec((1, C), lambda b: (0, 0)),         # gn_w
                pl.BlockSpec((1, C), lambda b: (0, 0)),         # gn_b
                pl.BlockSpec((C, G), lambda b: (0, 0)),         # group mask
                pl.BlockSpec((G, C), lambda b: (0, 0)),         # group mask^T
                pl.BlockSpec((C, 3 * C), lambda b: (0, 0)),     # fused qkv weight
            ],
            out_specs=[
                pl.BlockSpec((1, S, C), lambda b: (b, 0, 0)),
                pl.BlockSpec((1, S, C), lambda b: (b, 0, 0)),
                pl.BlockSpec((1, S, C), lambda b: (b, 0, 0)),
            ],
        ),
        compiler_params=pltpu.CompilerParams(
            dimension_semantics=("parallel",),
            vmem_limit_bytes=64 * 1024 * 1024),
    )(x, gn_w, gn_b, gmask, gmask_t, w_fused)

    # ---- kernel 2: tiled online-softmax attention + out proj + residual ----
    # Grid ordering: reduction (key) axis last; batch/query axes marked "parallel" for megacore.
    # x / wo / bo block indices are constant across ki, so their tiles stay resident in VMEM.
    out = pl.pallas_call(
        functools.partial(_flash_attn_kernel, n_head=n_head),
        out_shape=jax.ShapeDtypeStruct((B, S, C), x.dtype),
        grid_spec=pltpu.PrefetchScalarGridSpec(
            num_scalar_prefetch=0,
            grid=(B, S // TQ, S // TK),
            in_specs=[
                pl.BlockSpec((1, TQ, C), lambda b, qi, ki: (b, qi, 0)),   # q
                pl.BlockSpec((1, TK, C), lambda b, qi, ki: (b, ki, 0)),   # k
                pl.BlockSpec((1, TK, C), lambda b, qi, ki: (b, ki, 0)),   # v
                pl.BlockSpec((1, TQ, C), lambda b, qi, ki: (b, qi, 0)),   # x (residual)
                pl.BlockSpec((C, C), lambda b, qi, ki: (0, 0)),           # wo
                pl.BlockSpec((1, C), lambda b, qi, ki: (0, 0)),           # bo
            ],
            out_specs=pl.BlockSpec((1, TQ, C), lambda b, qi, ki: (b, qi, 0)),
            scratch_shapes=[
                pltpu.VMEM((n_head, TQ, 1), jnp.float32),    # m (running max)
                pltpu.VMEM((n_head, TQ, 1), jnp.float32),    # l (running sum)
                pltpu.VMEM((n_head, TQ, hd), jnp.float32),   # acc (unnormalized PV)
            ],
        ),
        compiler_params=pltpu.CompilerParams(
            dimension_semantics=("parallel", "parallel", "arbitrary"),
            vmem_limit_bytes=64 * 1024 * 1024),
    )(q, k, v, x, wo, bo)

    # (B, S, C) -> NCHW
    return jnp.transpose(out, (0, 2, 1)).reshape(B, C, H, W)


def self_attention_ref(x, params, *, n_head, norm_groups, eps=1e-5):
    """Pure-JAX (f32) mirror of the PyTorch forward, for correctness checking."""
    B, C, H, W = x.shape
    hd = C // n_head
    # GroupNorm
    xg = x.reshape(B, norm_groups, C // norm_groups, H, W)
    mean = xg.mean(axis=(2, 3, 4), keepdims=True)
    var = ((xg - mean) ** 2).mean(axis=(2, 3, 4), keepdims=True)
    norm = ((xg - mean) / jnp.sqrt(var + eps)).reshape(B, C, H, W)
    norm = norm * params["gn_weight"].reshape(1, C, 1, 1) + params["gn_bias"].reshape(1, C, 1, 1)
    # qkv 1x1 conv (no bias)
    wqkv = params["qkv_weight"].reshape(3 * C, C)
    qkv = jnp.einsum("oc,bchw->bohw", wqkv, norm).reshape(B, n_head, 3 * hd, H, W)
    q, k, v = qkv[:, :, :hd], qkv[:, :, hd:2 * hd], qkv[:, :, 2 * hd:]
    attn = jnp.einsum("bnchw,bncyx->bnhwyx", q, k) / math.sqrt(C)
    attn = attn.reshape(B, n_head, H, W, -1)
    attn = jax.nn.softmax(attn, axis=-1).reshape(B, n_head, H, W, H, W)
    out = jnp.einsum("bnhwyx,bncyx->bnchw", attn, v).reshape(B, C, H, W)
    wo = params["out_weight"].reshape(C, C)
    out = jnp.einsum("oc,bchw->bohw", wo, out) + params["out_bias"].reshape(1, C, 1, 1)
    return out + x


if __name__ == "__main__":
    # Small shapes; S = 256 so the query/key tiling (TQ = TK = 128) is actually exercised.
    B, C, H, W = 2, 8, 16, 16
    n_head, norm_groups = 2, 4

    key = jax.random.PRNGKey(0)
    k_x, k_gw, k_gb, k_qkv, k_ow, k_ob = jax.random.split(key, 6)

    x = jax.random.normal(k_x, (B, C, H, W), dtype=jnp.float32)
    params = {
        "gn_weight": 1.0 + 0.1 * jax.random.normal(k_gw, (C,), dtype=jnp.float32),
        "gn_bias": 0.1 * jax.random.normal(k_gb, (C,), dtype=jnp.float32),
        "qkv_weight": 0.2 * jax.random.normal(k_qkv, (3 * C, C, 1, 1), dtype=jnp.float32),
        "out_weight": 0.2 * jax.random.normal(k_ow, (C, C, 1, 1), dtype=jnp.float32),
        "out_bias": 0.1 * jax.random.normal(k_ob, (C,), dtype=jnp.float32),
    }

    out = self_attention_pallas(x, params, n_head=n_head, norm_groups=norm_groups)
    out = jax.block_until_ready(out)

    ref = self_attention_ref(x, params, n_head=n_head, norm_groups=norm_groups)
    assert out.shape == (B, C, H, W)
    max_err = float(jnp.max(jnp.abs(out - ref)))
    # bf16 MXU inputs (f32 accumulation) vs an all-f32 reference: loose-ish tolerance.
    assert jnp.allclose(out, ref, atol=5e-2, rtol=5e-2), max_err

    print("KERNEL_OK")
</pallas_src>

<mosaic_0001>
module attributes {stable_mosaic.version = 11 : i64} {
  func.func @_norm_qkv_kernel(%arg0: i32, %arg1: memref<1x256x8xf32, #tpu.memory_space<vmem>>, %arg2: memref<1x8xf32, #tpu.memory_space<vmem>>, %arg3: memref<1x8xf32, #tpu.memory_space<vmem>>, %arg4: memref<8x4xf32, #tpu.memory_space<vmem>>, %arg5: memref<4x8xf32, #tpu.memory_space<vmem>>, %arg6: memref<8x24xbf16, #tpu.memory_space<vmem>>, %arg7: memref<1x256x8xbf16, #tpu.memory_space<vmem>>, %arg8: memref<1x256x8xbf16, #tpu.memory_space<vmem>>, %arg9: memref<1x256x8xbf16, #tpu.memory_space<vmem>>) attributes {dimension_semantics = [#tpu.dimension_semantics<parallel>], iteration_bounds = array<i64: 2>, scalar_prefetch = 0 : i64, scratch_operands = 0 : i64, tpu.core_type = #tpu.core_type<tc>, window_params = [{transform_indices = @transform_0, window_bounds = array<i64: 1, 256, 8>}, {pipeline_mode = #tpu.pipeline_mode<synchronous>, transform_indices = @transform_1, window_bounds = array<i64: 1, 8>}, {pipeline_mode = #tpu.pipeline_mode<synchronous>, transform_indices = @transform_2, window_bounds = array<i64: 1, 8>}, {pipeline_mode = #tpu.pipeline_mode<synchronous>, transform_indices = @transform_3, window_bounds = array<i64: 8, 4>}, {pipeline_mode = #tpu.pipeline_mode<synchronous>, transform_indices = @transform_4, window_bounds = array<i64: 4, 8>}, {pipeline_mode = #tpu.pipeline_mode<synchronous>, transform_indices = @transform_5, window_bounds = array<i64: 8, 24>}, {transform_indices = @transform_6, window_bounds = array<i64: 1, 256, 8>}, {transform_indices = @transform_7, window_bounds = array<i64: 1, 256, 8>}, {transform_indices = @transform_8, window_bounds = array<i64: 1, 256, 8>}]} {
    %c0 = arith.constant 0 : index
    %c0_0 = arith.constant 0 : index
    %c0_1 = arith.constant 0 : index
    %0 = vector.load %arg1[%c0, %c0_0, %c0_1] : memref<1x256x8xf32, #tpu.memory_space<vmem>>, vector<1x256x8xf32>
    %1 = vector.shape_cast %0 : vector<1x256x8xf32> to vector<256x8xf32>
    %cst = arith.constant dense<0.000000e+00> : vector<8xf32>
    %2 = vector.multi_reduction <add>, %1, %cst [0] : vector<256x8xf32> to vector<8xf32>
    %3 = vector.shape_cast %2 : vector<8xf32> to vector<1x8xf32>
    %4 = arith.mulf %1, %1 : vector<256x8xf32>
    %cst_2 = arith.constant dense<0.000000e+00> : vector<8xf32>
    %5 = vector.multi_reduction <add>, %4, %cst_2 [0] : vector<256x8xf32> to vector<8xf32>
    %6 = vector.shape_cast %5 : vector<8xf32> to vector<1x8xf32>
    %c0_3 = arith.constant 0 : index
    %c0_4 = arith.constant 0 : index
    %7 = vector.load %arg4[%c0_3, %c0_4] : memref<8x4xf32, #tpu.memory_space<vmem>>, vector<8x4xf32>
    %cst_5 = arith.constant dense<0.000000e+00> : vector<1x4xf32>
    %8 = tpu.matmul %3, %7, %cst_5 {dimension_numbers = #tpu.dot_dimension_numbers<[1], [0], [0], [1], [0, 0, 1, 1], [], []>} : vector<1x8xf32>, vector<8x4xf32>, vector<1x4xf32> -> vector<1x4xf32>
    %cst_6 = arith.constant 5.120000e+02 : f32
    %9 = vector.broadcast %cst_6 : f32 to vector<1x4xf32>
    %10 = arith.divf %8, %9 : vector<1x4xf32>
    %c0_7 = arith.constant 0 : index
    %c0_8 = arith.constant 0 : index
    %11 = vector.load %arg4[%c0_7, %c0_8] : memref<8x4xf32, #tpu.memory_space<vmem>>, vector<8x4xf32>
    %cst_9 = arith.constant dense<0.000000e+00> : vector<1x4xf32>
    %12 = tpu.matmul %6, %11, %cst_9 {dimension_numbers = #tpu.dot_dimension_numbers<[1], [0], [0], [1], [0, 0, 1, 1], [], []>} : vector<1x8xf32>, vector<8x4xf32>, vector<1x4xf32> -> vector<1x4xf32>
    %cst_10 = arith.constant 5.120000e+02 : f32
    %13 = vector.broadcast %cst_10 : f32 to vector<1x4xf32>
    %14 = arith.divf %12, %13 : vector<1x4xf32>
    %15 = arith.mulf %10, %10 : vector<1x4xf32>
    %16 = arith.subf %14, %15 : vector<1x4xf32>
    %c0_11 = arith.constant 0 : index
    %c0_12 = arith.constant 0 : index
    %17 = vector.load %arg5[%c0_11, %c0_12] : memref<4x8xf32, #tpu.memory_space<vmem>>, vector<4x8xf32>
    %cst_13 = arith.constant dense<0.000000e+00> : vector<1x8xf32>
    %18 = tpu.matmul %10, %17, %cst_13 {dimension_numbers = #tpu.dot_dimension_numbers<[1], [0], [0], [1], [0, 0, 1, 1], [], []>} : vector<1x4xf32>, vector<4x8xf32>, vector<1x8xf32> -> vector<1x8xf32>
    %c0_14 = arith.constant 0 : index
    %c0_15 = arith.constant 0 : index
    %19 = vector.load %arg5[%c0_14, %c0_15] : memref<4x8xf32, #tpu.memory_space<vmem>>, vector<4x8xf32>
    %cst_16 = arith.constant dense<0.000000e+00> : vector<1x8xf32>
    %20 = tpu.matmul %16, %19, %cst_16 {dimension_numbers = #tpu.dot_dimension_numbers<[1], [0], [0], [1], [0, 0, 1, 1], [], []>} : vector<1x4xf32>, vector<4x8xf32>, vector<1x8xf32> -> vector<1x8xf32>
    %21 = vector.broadcast %18 : vector<1x8xf32> to vector<256x8xf32>
    %22 = arith.subf %1, %21 : vector<256x8xf32>
    %cst_17 = arith.constant 9.99999974E-6 : f32
    %23 = vector.broadcast %cst_17 : f32 to vector<1x8xf32>
    %24 = arith.addf %20, %23 : vector<1x8xf32>
    %25 = math.rsqrt %24 : vector<1x8xf32>
    %26 = vector.broadcast %25 : vector<1x8xf32> to vector<256x8xf32>
    %27 = arith.mulf %22, %26 : vector<256x8xf32>
    %c0_18 = arith.constant 0 : index
    %c0_19 = arith.constant 0 : index
    %28 = vector.load %arg2[%c0_18, %c0_19] : memref<1x8xf32, #tpu.memory_space<vmem>>, vector<1x8xf32>
    %29 = vector.broadcast %28 : vector<1x8xf32> to vector<256x8xf32>
    %30 = arith.mulf %27, %29 : vector<256x8xf32>
    %c0_20 = arith.constant 0 : index
    %c0_21 = arith.constant 0 : index
    %31 = vector.load %arg3[%c0_20, %c0_21] : memref<1x8xf32, #tpu.memory_space<vmem>>, vector<1x8xf32>
    %32 = vector.broadcast %31 : vector<1x8xf32> to vector<256x8xf32>
    %33 = arith.addf %30, %32 : vector<256x8xf32>
    %34 = arith.truncf %33 : vector<256x8xf32> to vector<256x8xbf16>
    %c0_22 = arith.constant 0 : index
    %c0_23 = arith.constant 0 : index
    %35 = vector.load %arg6[%c0_22, %c0_23] : memref<8x24xbf16, #tpu.memory_space<vmem>>, vector<8x24xbf16>
    %cst_24 = arith.constant dense<0.000000e+00> : vector<256x24xf32>
    %36 = tpu.matmul %34, %35, %cst_24 {dimension_numbers = #tpu.dot_dimension_numbers<[1], [0], [0], [1], [0, 0, 1, 1], [], []>} : vector<256x8xbf16>, vector<8x24xbf16>, vector<256x24xf32> -> vector<256x24xf32>
    %37 = vector.extract_strided_slice %36 {offsets = [0, 0], sizes = [256, 8], strides = [1, 1]} : vector<256x24xf32> to vector<256x8xf32>
    %cst_25 = arith.constant 0.353553385 : f32
    %38 = vector.broadcast %cst_25 : f32 to vector<256x8xf32>
    %39 = arith.mulf %37, %38 : vector<256x8xf32>
    %40 = arith.truncf %39 : vector<256x8xf32> to vector<256x8xbf16>
    %c0_26 = arith.constant 0 : index
    %c0_27 = arith.constant 0 : index
    %c0_28 = arith.constant 0 : index
    %41 = vector.load %arg7[%c0_26, %c0_27, %c0_28] : memref<1x256x8xbf16, #tpu.memory_space<vmem>>, vector<1x256x8xbf16>
    %42 = vector.shape_cast %41 : vector<1x256x8xbf16> to vector<256x8xbf16>
    %43 = vector.shape_cast %40 : vector<256x8xbf16> to vector<1x256x8xbf16>
    tpu.vector_store %arg7[%c0_26, %c0_27, %c0_28], %43 {strides = array<i32>} : memref<1x256x8xbf16, #tpu.memory_space<vmem>>, vector<1x256x8xbf16>,
    %44 = vector.extract_strided_slice %36 {offsets = [0, 8], sizes = [256, 8], strides = [1, 1]} : vector<256x24xf32> to vector<256x8xf32>
    %45 = arith.truncf %44 : vector<256x8xf32> to vector<256x8xbf16>
    %c0_29 = arith.constant 0 : index
    %c0_30 = arith.constant 0 : index
    %c0_31 = arith.constant 0 : index
    %46 = vector.load %arg8[%c0_29, %c0_30, %c0_31] : memref<1x256x8xbf16, #tpu.memory_space<vmem>>, vector<1x256x8xbf16>
    %47 = vector.shape_cast %46 : vector<1x256x8xbf16> to vector<256x8xbf16>
    %48 = vector.shape_cast %45 : vector<256x8xbf16> to vector<1x256x8xbf16>
    tpu.vector_store %arg8[%c0_29, %c0_30, %c0_31], %48 {strides = array<i32>} : memref<1x256x8xbf16, #tpu.memory_space<vmem>>, vector<1x256x8xbf16>,
    %49 = vector.extract_strided_slice %36 {offsets = [0, 16], sizes = [256, 8], strides = [1, 1]} : vector<256x24xf32> to vector<256x8xf32>
    %50 = arith.truncf %49 : vector<256x8xf32> to vector<256x8xbf16>
    %c0_32 = arith.constant 0 : index
    %c0_33 = arith.constant 0 : index
    %c0_34 = arith.constant 0 : index
    %51 = vector.load %arg9[%c0_32, %c0_33, %c0_34] : memref<1x256x8xbf16, #tpu.memory_space<vmem>>, vector<1x256x8xbf16>
    %52 = vector.shape_cast %51 : vector<1x256x8xbf16> to vector<256x8xbf16>
    %53 = vector.shape_cast %50 : vector<256x8xbf16> to vector<1x256x8xbf16>
    tpu.vector_store %arg9[%c0_32, %c0_33, %c0_34], %53 {strides = array<i32>} : memref<1x256x8xbf16, #tpu.memory_space<vmem>>, vector<1x256x8xbf16>,
    return
  }
  func.func @transform_0(%arg0: i32) -> (i32, i32, i32) {
    %c0_i32 = arith.constant 0 : i32
    %c0_i32_0 = arith.constant 0 : i32
    %c0_i32_1 = arith.constant 0 : i32
    return %arg0, %c0_i32, %c0_i32_0 : i32, i32, i32
  }
  func.func @transform_1(%arg0: i32) -> (i32, i32) {
    %c0_i32 = arith.constant 0 : i32
    %c0_i32_0 = arith.constant 0 : i32
    %c0_i32_1 = arith.constant 0 : i32
    return %c0_i32, %c0_i32_0 : i32, i32
  }
  func.func @transform_2(%arg0: i32) -> (i32, i32) {
    %c0_i32 = arith.constant 0 : i32
    %c0_i32_0 = arith.constant 0 : i32
    %c0_i32_1 = arith.constant 0 : i32
    return %c0_i32, %c0_i32_0 : i32, i32
  }
  func.func @transform_3(%arg0: i32) -> (i32, i32) {
    %c0_i32 = arith.constant 0 : i32
    %c0_i32_0 = arith.constant 0 : i32
    %c0_i32_1 = arith.constant 0 : i32
    return %c0_i32, %c0_i32_0 : i32, i32
  }
  func.func @transform_4(%arg0: i32) -> (i32, i32) {
    %c0_i32 = arith.constant 0 : i32
    %c0_i32_0 = arith.constant 0 : i32
    %c0_i32_1 = arith.constant 0 : i32
    return %c0_i32, %c0_i32_0 : i32, i32
  }
  func.func @transform_5(%arg0: i32) -> (i32, i32) {
    %c0_i32 = arith.constant 0 : i32
    %c0_i32_0 = arith.constant 0 : i32
    %c0_i32_1 = arith.constant 0 : i32
    return %c0_i32, %c0_i32_0 : i32, i32
  }
  func.func @transform_6(%arg0: i32) -> (i32, i32, i32) {
    %c0_i32 = arith.constant 0 : i32
    %c0_i32_0 = arith.constant 0 : i32
    %c0_i32_1 = arith.constant 0 : i32
    return %arg0, %c0_i32, %c0_i32_0 : i32, i32, i32
  }
  func.func @transform_7(%arg0: i32) -> (i32, i32, i32) {
    %c0_i32 = arith.constant 0 : i32
    %c0_i32_0 = arith.constant 0 : i32
    %c0_i32_1 = arith.constant 0 : i32
    return %arg0, %c0_i32, %c0_i32_0 : i32, i32, i32
  }
  func.func @transform_8(%arg0: i32) -> (i32, i32, i32) {
    %c0_i32 = arith.constant 0 : i32
    %c0_i32_0 = arith.constant 0 : i32
    %c0_i32_1 = arith.constant 0 : i32
    return %arg0, %c0_i32, %c0_i32_0 : i32, i32, i32
  }
}

</mosaic_0001>

<llo_original>
// kernel: tpu_custom_call.1
$region0: #{tpu_custom_call.1}
  #allocation0 [shape = 'u32[]', space=smem, size = 0x4, offset = 0x4, fixed_abs, tag = 'smem constant byte address 0x4 - core index']
  #allocation1 [shape = 'u32[144,128]{1,0:T(1,128)}', space=vmem, size = 0x12000, scoped, tag = 'internal scratch']
  %s0 = inlined_call_operand.hbm [shape: f32[2,256,8], index: 0, kind: input, shape index: {}]
  %s1 = inlined_call_operand.hbm [shape: f32[1,8], index: 1, kind: input, shape index: {}]
  %s2 = inlined_call_operand.hbm [shape: f32[1,8], index: 2, kind: input, shape index: {}]
  %s3 = inlined_call_operand.hbm [shape: f32[8,4], index: 3, kind: input, shape index: {}]
  %s4 = inlined_call_operand.hbm [shape: f32[4,8], index: 4, kind: input, shape index: {}]
  %s5 = inlined_call_operand.hbm [shape: bf16[8,24], index: 5, kind: input, shape index: {}]
  %s6 = inlined_call_operand.hbm [shape: bf16[2,256,8], index: 6, kind: output, shape index: {0}]
  %s7 = inlined_call_operand.hbm [shape: bf16[2,256,8], index: 7, kind: output, shape index: {1}]
  %s8 = inlined_call_operand.hbm [shape: bf16[2,256,8], index: 8, kind: output, shape index: {2}]
  %9 = xla_tuple %s6, %s7, %s8
  %s10 = sld [smem:[#allocation0]]
  $region97: #{tpu_custom_call.1} parent=0
    _
  %s12 = ssub.s32 1, %s10
  %s13 = scalar_select 0, %s12, %s10
  $region1: #{tpu_custom_call.1} parent=0
    #allocation2 [shape = 'u8[262144]{0}', space=vmem, size = 0x40000, scoped, tag = 'input window, operand 0']
    #allocation3 [shape = 's32[2]{0}', space=sflag, size = 0x8, scoped, tag = 'scoped memory for tpu_custom_call.1']
    #allocation4 [shape = 's32[2]{0}', space=sflag, size = 0x8, scoped, tag = 'scoped memory for tpu_custom_call.1']
    #allocation5 [shape = 'u8[512]{0}', space=vmem, size = 0x400, scoped, tag = 'input window, operand 1, single buffered']
    #allocation6 [shape = 's32[1]{0}', space=sflag, size = 0x4, scoped, tag = 'scoped memory for tpu_custom_call.1']
    #allocation7 [shape = 'u8[512]{0}', space=vmem, size = 0x400, scoped, tag = 'input window, operand 2, single buffered']
    #allocation8 [shape = 'u8[4096]{0}', space=vmem, size = 0x1000, scoped, tag = 'input window, operand 3, single buffered']
    #allocation9 [shape = 's32[1]{0}', space=sflag, size = 0x4, scoped, tag = 'scoped memory for tpu_custom_call.1']
    #allocation10 [shape = 'u8[2048]{0}', space=vmem, size = 0x800, scoped, tag = 'input window, operand 4, single buffered']
    #allocation11 [shape = 'u8[2048]{0}', space=vmem, size = 0x800, scoped, tag = 'input window, operand 5, single buffered']
    #allocation12 [shape = 's32[1]{0}', space=sflag, size = 0x4, scoped, tag = 'scoped memory for tpu_custom_call.1']
    #allocation13 [shape = 'u8[131072]{0}', space=vmem, size = 0x20000, scoped, tag = 'output window, operand 0']
    #allocation14 [shape = 'u8[131072]{0}', space=vmem, size = 0x20000, scoped, tag = 'output window, operand 1']
    #allocation15 [shape = 's32[2]{0}', space=sflag, size = 0x8, scoped, tag = 'scoped memory for tpu_custom_call.1']
    #allocation16 [shape = 'u8[131072]{0}', space=vmem, size = 0x20000, scoped, tag = 'output window, operand 2']
    %14 = vsyncpa [#allocation3], 0
    %s15 = scalar_lea.sflag [#allocation3], 1
    %16 = vsyncpa %s15, 0
    %17 = vsyncpa [#allocation6], 0
    %18 = vsyncpa [#allocation9], 0
    %19 = vsyncpa [#allocation12], 0
    %20 = vsyncpa [#allocation4], 0
    %s21 = scalar_lea.sflag [#allocation4], 1
    %22 = vsyncpa %s21, 0
    %23 = vsyncpa [#allocation15], 0
    %s24 = scalar_lea.sflag [#allocation15], 1
    %25 = vsyncpa %s24, 0
    loop: start=0, step=1, limit=4
    $region2: #{tpu_custom_call.1} parent=1 // loop_pre_header
      _
    $region3: #{tpu_custom_call.1} parent=1 // loop_header
      %s27 = sphi 0, %s31
      %p28 = scmp.ge.s32.totalorder %s27, 4
      %s37 = sphi 0, %s39
      %s40 = sphi 0, %s37
      %s41 = sphi 0, %s40
      %s57 = sphi 0, %s41
      %s61 = sphi 0, %s61
      %s63 = sphi 0, %s61
      %s64 = sphi 0, %s63
      %s78 = sphi 0, %s64
      %s82 = sphi 0, %s82
      %s84 = sphi 0, %s82
      %s85 = sphi 0, %s84
      %s99 = sphi 0, %s85
      %s103 = sphi 0, %s103
      %s105 = sphi 0, %s103
      %s106 = sphi 0, %s105
      %s120 = sphi 0, %s106
      %s124 = sphi 0, %s124
      %s126 = sphi 0, %s124
      %s127 = sphi 0, %s126
      %s141 = sphi 0, %s127
      %s145 = sphi 0, %s145
      %s147 = sphi 0, %s145
      %s148 = sphi 0, %s147
      %s162 = sphi 0, %s148
      %s168 = sphi 0, %s170
      %s171 = sphi 0, %s168
      %s172 = sphi 0, %s171
      %s188 = sphi 0, %s172
      %s194 = sphi 0, %s196
      %s197 = sphi 0, %s194
      %s198 = sphi 0, %s197
      %s214 = sphi 0, %s198
      %s220 = sphi 0, %s222
      %s223 = sphi 0, %s220
      %s224 = sphi 0, %s223
      %s240 = sphi 0, %s224
    $region4: #{tpu_custom_call.1} parent=1 // loop_header_branch
      %30 = sbr.rel (%p28) target = $region8
    $region5: #{tpu_custom_call.1} parent=1 // loop_body
      %s32 = ssub.s32 %s27, 1
      %s33 = ssub.s32 %s27, 2
      %s34 = sadd.s32 %s27, 1
      %s35 = ssub.s32 %s27, %s34
      %p36 = scmp.eq.s32.totalorder %s35, 0
      %s38 = sadd.s32 %s37, 1
      %s39 = scalar_select %p36, %s37, %s38
      %p42 = pneg %p36
      %p43 = scmp.eq.s32.totalorder %s27, 1
      %p44 = por %p42, %p43
      %p45 = scmp.ne.s32.totalorder %s37, %s40
      %p46 = scmp.eq.s32.totalorder %s27, 0
      %p47 = por %p45, %p46
      %p48 = scmp.ne.s32.totalorder %s37, %s40
      %p49 = scmp.eq.s32.totalorder %s32, 1
      %p50 = por %p48, %p49
      %p51 = scmp.ne.s32.totalorder %s40, %s41
      %p52 = scmp.eq.s32.totalorder %s32, 0
      %p53 = por %p51, %p52
      %p54 = scmp.ne.s32.totalorder %s40, %s41
      %p55 = scmp.eq.s32.totalorder %s33, 1
      %p56 = por %p54, %p55
      %p58 = scmp.ne.s32.totalorder %s41, %s57
      %p59 = scmp.eq.s32.totalorder %s33, 0
      %p60 = por %p58, %p59
      %s62 = sadd.s32 %s61, 1
      %p65 = scmp.eq.s32.totalorder %s27, 1
      %p66 = scmp.ne.s32.totalorder %s61, %s63
      %p67 = scmp.eq.s32.totalorder %s27, 0
      %p68 = por %p66, %p67
      %p69 = scmp.ne.s32.totalorder %s61, %s63
      %p70 = scmp.eq.s32.totalorder %s32, 1
      %p71 = por %p69, %p70
      %p72 = scmp.ne.s32.totalorder %s63, %s64
      %p73 = scmp.eq.s32.totalorder %s32, 0
      %p74 = por %p72, %p73
      %p75 = scmp.ne.s32.totalorder %s63, %s64
      %p76 = scmp.eq.s32.totalorder %s33, 1
      %p77 = por %p75, %p76
      %p79 = scmp.ne.s32.totalorder %s64, %s78
      %p80 = scmp.eq.s32.totalorder %s33, 0
      %p81 = por %p79, %p80
      %s83 = sadd.s32 %s82, 1
      %p86 = scmp.eq.s32.totalorder %s27, 1
      %p87 = scmp.ne.s32.totalorder %s82, %s84
      %p88 = scmp.eq.s32.totalorder %s27, 0
      %p89 = por %p87, %p88
      %p90 = scmp.ne.s32.totalorder %s82, %s84
      %p91 = scmp.eq.s32.totalorder %s32, 1
      %p92 = por %p90, %p91
      %p93 = scmp.ne.s32.totalorder %s84, %s85
      %p94 = scmp.eq.s32.totalorder %s32, 0
      %p95 = por %p93, %p94
      %p96 = scmp.ne.s32.totalorder %s84, %s85
      %p97 = scmp.eq.s32.totalorder %s33, 1
      %p98 = por %p96, %p97
      %p100 = scmp.ne.s32.totalorder %s85, %s99
      %p101 = scmp.eq.s32.totalorder %s33, 0
      %p102 = por %p100, %p101
      %s104 = sadd.s32 %s103, 1
      %p107 = scmp.eq.s32.totalorder %s27, 1
      %p108 = scmp.ne.s32.totalorder %s103, %s105
      %p109 = scmp.eq.s32.totalorder %s27, 0
      %p110 = por %p108, %p109
      %p111 = scmp.ne.s32.totalorder %s103, %s105
      %p112 = scmp.eq.s32.totalorder %s32, 1
      %p113 = por %p111, %p112
      %p114 = scmp.ne.s32.totalorder %s105, %s106
      %p115 = scmp.eq.s32.totalorder %s32, 0
      %p116 = por %p114, %p115
      %p117 = scmp.ne.s32.totalorder %s105, %s106
      %p118 = scmp.eq.s32.totalorder %s33, 1
      %p119 = por %p117, %p118
      %p121 = scmp.ne.s32.totalorder %s106, %s120
      %p122 = scmp.eq.s32.totalorder %s33, 0
      %p123 = por %p121, %p122
      %s125 = sadd.s32 %s124, 1
      %p128 = scmp.eq.s32.totalorder %s27, 1
      %p129 = scmp.ne.s32.totalorder %s124, %s126
      %p130 = scmp.eq.s32.totalorder %s27, 0
      %p131 = por %p129, %p130
      %p132 = scmp.ne.s32.totalorder %s124, %s126
      %p133 = scmp.eq.s32.totalorder %s32, 1
      %p134 = por %p132, %p133
      %p135 = scmp.ne.s32.totalorder %s126, %s127
      %p136 = scmp.eq.s32.totalorder %s32, 0
      %p137 = por %p135, %p136
      %p138 = scmp.ne.s32.totalorder %s126, %s127
      %p139 = scmp.eq.s32.totalorder %s33, 1
      %p140 = por %p138, %p139
      %p142 = scmp.ne.s32.totalorder %s127, %s141
      %p143 = scmp.eq.s32.totalorder %s33, 0
      %p144 = por %p142, %p143
      %s146 = sadd.s32 %s145, 1
      %p149 = scmp.eq.s32.totalorder %s27, 1
      %p150 = scmp.ne.s32.totalorder %s145, %s147
      %p151 = scmp.eq.s32.totalorder %s27, 0
      %p152 = por %p150, %p151
      %p153 = scmp.ne.s32.totalorder %s145, %s147
      %p154 = scmp.eq.s32.totalorder %s32, 1
      %p155 = por %p153, %p154
      %p156 = scmp.ne.s32.totalorder %s147, %s148
      %p157 = scmp.eq.s32.totalorder %s32, 0
      %p158 = por %p156, %p157
      %p159 = scmp.ne.s32.totalorder %s147, %s148
      %p160 = scmp.eq.s32.totalorder %s33, 1
      %p161 = por %p159, %p160
      %p163 = scmp.ne.s32.totalorder %s148, %s162
      %p164 = scmp.eq.s32.totalorder %s33, 0
      %p165 = por %p163, %p164
      %s166 = ssub.s32 %s27, %s34
      %p167 = scmp.eq.s32.totalorder %s166, 0
      %s169 = sadd.s32 %s168, 1
      %s170 = scalar_select %p167, %s168, %s169
      %p173 = pneg %p167
      %p174 = scmp.eq.s32.totalorder %s27, 1
      %p175 = por %p173, %p174
      %p176 = scmp.ne.s32.totalorder %s168, %s171
      %p177 = scmp.eq.s32.totalorder %s27, 0
      %p178 = por %p176, %p177
      %p179 = scmp.ne.s32.totalorder %s168, %s171
      %p180 = scmp.eq.s32.totalorder %s32, 1
      %p181 = por %p179, %p180
      %p182 = scmp.ne.s32.totalorder %s171, %s172
      %p183 = scmp.eq.s32.totalorder %s32, 0
      %p184 = por %p182, %p183
      %p185 = scmp.ne.s32.totalorder %s171, %s172
      %p186 = scmp.eq.s32.totalorder %s33, 1
      %p187 = por %p185, %p186
      %p189 = scmp.ne.s32.totalorder %s172, %s188
      %p190 = scmp.eq.s32.totalorder %s33, 0
      %p191 = por %p189, %p190
      %s192 = ssub.s32 %s27, %s34
      %p193 = scmp.eq.s32.totalorder %s192, 0
      %s195 = sadd.s32 %s194, 1
      %s196 = scalar_select %p193, %s194, %s195
      %p199 = pneg %p193
      %p200 = scmp.eq.s32.totalorder %s27, 1
      %p201 = por %p199, %p200
      %p202 = scmp.ne.s32.totalorder %s194, %s197
      %p203 = scmp.eq.s32.totalorder %s27, 0
      %p204 = por %p202, %p203
      %p205 = scmp.ne.s32.totalorder %s194, %s197
      %p206 = scmp.eq.s32.totalorder %s32, 1
      %p207 = por %p205, %p206
      %p208 = scmp.ne.s32.totalorder %s197, %s198
      %p209 = scmp.eq.s32.totalorder %s32, 0
      %p210 = por %p208, %p209
      %p211 = scmp.ne.s32.totalorder %s197, %s198
      %p212 = scmp.eq.s32.totalorder %s33, 1
      %p213 = por %p211, %p212
      %p215 = scmp.ne.s32.totalorder %s198, %s214
      %p216 = scmp.eq.s32.totalorder %s33, 0
      %p217 = por %p215, %p216
      %s218 = ssub.s32 %s27, %s34
      %p219 = scmp.eq.s32.totalorder %s218, 0
      %s221 = sadd.s32 %s220, 1
      %s222 = scalar_select %p219, %s220, %s221
      %p225 = pneg %p219
      %p226 = scmp.eq.s32.totalorder %s27, 1
      %p227 = por %p225, %p226
      %p228 = scmp.ne.s32.totalorder %s220, %s223
      %p229 = scmp.eq.s32.totalorder %s27, 0
      %p230 = por %p228, %p229
      %p231 = scmp.ne.s32.totalorder %s220, %s223
      %p232 = scmp.eq.s32.totalorder %s32, 1
      %p233 = por %p231, %p232
      %p234 = scmp.ne.s32.totalorder %s223, %s224
      %p235 = scmp.eq.s32.totalorder %s32, 0
      %p236 = por %p234, %p235
      %p237 = scmp.ne.s32.totalorder %s223, %s224
      %p238 = scmp.eq.s32.totalorder %s33, 1
      %p239 = por %p237, %p238
      %p241 = scmp.ne.s32.totalorder %s224, %s240
      %p242 = scmp.eq.s32.totalorder %s33, 0
      %p243 = por %p241, %p242
      %p244 = scmp.le.s32.totalorder 1, %s27
      %p245 = scmp.lt.s32.totalorder %s27, 3
      %p246 = pnand %p244, %p245
      %p247 = pneg %p246
      // Predicated region
      $region9: #{tpu_custom_call.1} parent=5 // pred_check
        _
      $region10: #{tpu_custom_call.1} parent=5 // pred_check_branch
        %249 = sbr.rel (%p246) target = $region12
      $region11: #{tpu_custom_call.1} parent=5 // pred_region
        %s250 = ssub.s32 %s27, 1
        // Predicated region
        $region13: #{tpu_custom_call.1} parent=11 // pred_check
          %p251 = pneg %p74
        $region14: #{tpu_custom_call.1} parent=11 // pred_check_branch
          %253 = sbr.rel (%p251) target = $region16
        $region15: #{tpu_custom_call.1} parent=11 // pred_region
          %s255 = ssub.s32 16, 16
          %256 = vsyncadd [#allocation6], %s255
          %s258 = sshll.u32 [#allocation5], 4
          %s259 = int_to_ptr.vmem [resolvable:$true] %s258
          %261 = dma.hbm_to_vmem [thread:$0]  %s1, 16, %s259, [#allocation6]
        $region16: #{tpu_custom_call.1} parent=11 // pred_fallthru
          _
        // Predicated region
        $region17: #{tpu_custom_call.1} parent=11 // pred_check
          %p262 = pneg %p95
        $region18: #{tpu_custom_call.1} parent=11 // pred_check_branch
          %264 = sbr.rel (%p262) target = $region20
        $region19: #{tpu_custom_call.1} parent=11 // pred_region
          %s266 = ssub.s32 16, 16
          %267 = vsyncadd [#allocation6], %s266
          %s269 = sshll.u32 [#allocation7], 4
          %s270 = int_to_ptr.vmem [resolvable:$true] %s269
          %272 = dma.hbm_to_vmem [thread:$0]  %s2, 16, %s270, [#allocation6]
        $region20: #{tpu_custom_call.1} parent=11 // pred_fallthru
          _
        // Predicated region
        $region21: #{tpu_custom_call.1} parent=11 // pred_check
          %p273 = pneg %p116
        $region22: #{tpu_custom_call.1} parent=11 // pred_check_branch
          %275 = sbr.rel (%p273) target = $region24
        $region23: #{tpu_custom_call.1} parent=11 // pred_region
          %s277 = ssub.s32 128, 128
          %278 = vsyncadd [#allocation9], %s277
          %s280 = sshll.u32 [#allocation8], 4
          %s281 = int_to_ptr.vmem [resolvable:$true] %s280
          %283 = dma.hbm_to_vmem [thread:$0]  %s3, 128, %s281, [#allocation9]
        $region24: #{tpu_custom_call.1} parent=11 // pred_fallthru
          _
        // Predicated region
        $region25: #{tpu_custom_call.1} parent=11 // pred_check
          %p284 = pneg %p137
        $region26: #{tpu_custom_call.1} parent=11 // pred_check_branch
          %286 = sbr.rel (%p284) target = $region28
        $region27: #{tpu_custom_call.1} parent=11 // pred_region
          %s288 = ssub.s32 64, 64
          %289 = vsyncadd [#allocation9], %s288
          %s291 = sshll.u32 [#allocation10], 4
          %s292 = int_to_ptr.vmem [resolvable:$true] %s291
          %294 = dma.hbm_to_vmem [thread:$0]  %s4, 64, %s292, [#allocation9]
        $region28: #{tpu_custom_call.1} parent=11 // pred_fallthru
          _
        // Predicated region
        $region29: #{tpu_custom_call.1} parent=11 // pred_check
          %p295 = pneg %p158
        $region30: #{tpu_custom_call.1} parent=11 // pred_check_branch
          %297 = sbr.rel (%p295) target = $region32
        $region31: #{tpu_custom_call.1} parent=11 // pred_region
          %s299 = ssub.s32 64, 64
          %300 = vsyncadd [#allocation12], %s299
          %s302 = sshll.u32 [#allocation11], 4
          %s303 = int_to_ptr.vmem [resolvable:$true] %s302
          %305 = dma.hbm_to_vmem [thread:$0]  %s5, 64, %s303, [#allocation12]
        $region32: #{tpu_custom_call.1} parent=11 // pred_fallthru
          _
      $region12: #{tpu_custom_call.1} parent=5 // pred_fallthru
        _
      %p306 = scmp.lt.s32.totalorder %s27, 2
      // Predicated region
      $region33: #{tpu_custom_call.1} parent=5 // pred_check
        %p307 = pneg %p306
      $region34: #{tpu_custom_call.1} parent=5 // pred_check_branch
        %309 = sbr.rel (%p307) target = $region36
      $region35: #{tpu_custom_call.1} parent=5 // pred_region
        // Predicated region
        $region37: #{tpu_custom_call.1} parent=35 // pred_check
          %p310 = pneg %p47
        $region38: #{tpu_custom_call.1} parent=35 // pred_check_branch
          %312 = sbr.rel (%p310) target = $region40
        $region39: #{tpu_custom_call.1} parent=35 // pred_region
          %s313 = sand.u32 %s37, 1
          %s314 = scalar_lea.sflag [#allocation3], %s313
          %s315 = sand.u32 %s37, 1
          %s316 = smul.addr %s315, 256
          %s317 = scalar_lea.vmem [#allocation2], %s316
          %s319 = ssub.s32 4096, 4096
          %320 = vsyncadd %s314, %s319
          %s321 = smul.addr %s27, 32
          %s322 = smul.addr %s321, 128
          %s323 = scalar_lea.hbm %s0, %s322
          %s324 = sshll.u32 %s317, 4
          %s325 = int_to_ptr.vmem [resolvable:$true] %s324
          %330 = dma.hbm_to_vmem [thread:$0]  %s323, 4096, %s325, %s314, 128, 128, 8
        $region40: #{tpu_custom_call.1} parent=35 // pred_fallthru
          _
      $region36: #{tpu_custom_call.1} parent=5 // pred_fallthru
        _
      %p331 = scmp.le.s32.totalorder 1, %s27
      %p332 = scmp.lt.s32.totalorder %s27, 3
      %p333 = pnand %p331, %p332
      %p334 = pneg %p333
      // Predicated region
      $region41: #{tpu_custom_call.1} parent=5 // pred_check
        _
      $region42: #{tpu_custom_call.1} parent=5 // pred_check_branch
        %336 = sbr.rel (%p333) target = $region44
      $region43: #{tpu_custom_call.1} parent=5 // pred_region
        %s337 = ssub.s32 %s27, 1
        %s338 = sand.u32 %s40, 1
        %s339 = scalar_lea.sflag [#allocation3], %s338
        %s340 = sand.u32 %s40, 1
        %s341 = smul.addr %s340, 256
        %s342 = scalar_lea.vmem [#allocation2], %s341
        // Predicated region
        $region45: #{tpu_custom_call.1} parent=43 // pred_check
          %p343 = pneg %p53
        $region46: #{tpu_custom_call.1} parent=43 // pred_check_branch
          %345 = sbr.rel (%p343) target = $region48
        $region47: #{tpu_custom_call.1} parent=43 // pred_region
          %346 = dma.done %s339, 4096
        $region48: #{tpu_custom_call.1} parent=43 // pred_fallthru
          _
        // Predicated region
        $region49: #{tpu_custom_call.1} parent=43 // pred_check
          %p347 = pneg %p74
        $region50: #{tpu_custom_call.1} parent=43 // pred_check_branch
          %349 = sbr.rel (%p347) target = $region52
        $region51: #{tpu_custom_call.1} parent=43 // pred_region
          %350 = dma.done [#allocation6], 16
        $region52: #{tpu_custom_call.1} parent=43 // pred_fallthru
          _
        // Predicated region
        $region53: #{tpu_custom_call.1} parent=43 // pred_check
          %p351 = pneg %p95
        $region54: #{tpu_custom_call.1} parent=43 // pred_check_branch
          %353 = sbr.rel (%p351) target = $region56
        $region55: #{tpu_custom_call.1} parent=43 // pred_region
          %354 = dma.done [#allocation6], 16
        $region56: #{tpu_custom_call.1} parent=43 // pred_fallthru
          _
        // Predicated region
        $region57: #{tpu_custom_call.1} parent=43 // pred_check
          %p355 = pneg %p116
        $region58: #{tpu_custom_call.1} parent=43 // pred_check_branch
          %357 = sbr.rel (%p355) target = $region60
        $region59: #{tpu_custom_call.1} parent=43 // pred_region
          %358 = dma.done [#allocation9], 128
        $region60: #{tpu_custom_call.1} parent=43 // pred_fallthru
          _
        // Predicated region
        $region61: #{tpu_custom_call.1} parent=43 // pred_check
          %p359 = pneg %p137
        $region62: #{tpu_custom_call.1} parent=43 // pred_check_branch
          %361 = sbr.rel (%p359) target = $region64
        $region63: #{tpu_custom_call.1} parent=43 // pred_region
          %362 = dma.done [#allocation9], 64
        $region64: #{tpu_custom_call.1} parent=43 // pred_fallthru
          _
        // Predicated region
        $region65: #{tpu_custom_call.1} parent=43 // pred_check
          %p363 = pneg %p158
        $region66: #{tpu_custom_call.1} parent=43 // pred_check_branch
          %365 = sbr.rel (%p363) target = $region68
        $region67: #{tpu_custom_call.1} parent=43 // pred_region
          %366 = dma.done [#allocation12], 64
        $region68: #{tpu_custom_call.1} parent=43 // pred_fallthru
          _
        %s367 = sand.u32 %s40, 1
        %s368 = scalar_lea.sflag [#allocation3], %s367
        %s369 = sand.u32 %s40, 1
        %s370 = smul.addr %s369, 256
        %s371 = scalar_lea.vmem [#allocation2], %s370
        %p372 = pneg %p53
        %p373 = pneg %p50
        %p374 = pneg %p74
        %p375 = pneg %p71
        %p376 = pneg %p95
        %p377 = pneg %p92
        %p378 = pneg %p116
        %p379 = pneg %p113
        %p380 = pneg %p137
        %p381 = pneg %p134
        %p382 = pneg %p158
        %p383 = pneg %p155
        %p384 = pneg %p184
        %p385 = pneg %p181
        %s386 = sand.u32 %s171, 1
        %s387 = scalar_lea.sflag [#allocation4], %s386
        %s388 = sand.u32 %s171, 1
        %s389 = smul.addr %s388, 128
        %s390 = scalar_lea.vmem [#allocation13], %s389
        %p391 = pneg %p210
        %p392 = pneg %p207
        %s393 = sand.u32 %s32, 1
        %s394 = scalar_lea.sflag [#allocation15], %s393
        %s395 = sand.u32 %s197, 1
        %s396 = smul.addr %s395, 128
        %s397 = scalar_lea.vmem [#allocation14], %s396
        %p398 = pneg %p236
        %p399 = pneg %p233
        %s400 = sand.u32 %s32, 1
        %s401 = scalar_lea.sflag [#allocation15], %s400
        %s402 = sand.u32 %s223, 1
        %s403 = smul.addr %s402, 128
        %s404 = scalar_lea.vmem [#allocation16], %s403
        %v406 = vld [vmem:[%s342] sm:$0xff]
        %v407 = vld [vmem:[%s342 + $0x8] sm:$0xff]
        %v408 = vld [vmem:[%s342 + $0x10] sm:$0xff]
        %v409 = vld [vmem:[%s342 + $0x18] sm:$0xff]
        %v410 = vld [vmem:[%s342 + $0x20] sm:$0xff]
        %v411 = vld [vmem:[%s342 + $0x28] sm:$0xff]
        %v412 = vld [vmem:[%s342 + $0x30] sm:$0xff]
        %v413 = vld [vmem:[%s342 + $0x38] sm:$0xff]
        %v414 = vld [vmem:[%s342 + $0x40] sm:$0xff]
        %v415 = vld [vmem:[%s342 + $0x48] sm:$0xff]
        %v416 = vld [vmem:[%s342 + $0x50] sm:$0xff]
        %v417 = vld [vmem:[%s342 + $0x58] sm:$0xff]
        %v418 = vld [vmem:[%s342 + $0x60] sm:$0xff]
        %v419 = vld [vmem:[%s342 + $0x68] sm:$0xff]
        %v420 = vld [vmem:[%s342 + $0x70] sm:$0xff]
        %v421 = vld [vmem:[%s342 + $0x78] sm:$0xff]
        %v422 = vld [vmem:[%s342 + $0x80] sm:$0xff]
        %v423 = vld [vmem:[%s342 + $0x88] sm:$0xff]
        %v424 = vld [vmem:[%s342 + $0x90] sm:$0xff]
        %v425 = vld [vmem:[%s342 + $0x98] sm:$0xff]
        %v426 = vld [vmem:[%s342 + $0xa0] sm:$0xff]
        %v427 = vld [vmem:[%s342 + $0xa8] sm:$0xff]
        %v428 = vld [vmem:[%s342 + $0xb0] sm:$0xff]
        %v429 = vld [vmem:[%s342 + $0xb8] sm:$0xff]
        %v430 = vld [vmem:[%s342 + $0xc0] sm:$0xff]
        %v431 = vld [vmem:[%s342 + $0xc8] sm:$0xff]
        %v432 = vld [vmem:[%s342 + $0xd0] sm:$0xff]
        %v433 = vld [vmem:[%s342 + $0xd8] sm:$0xff]
        %v434 = vld [vmem:[%s342 + $0xe0] sm:$0xff]
        %v435 = vld [vmem:[%s342 + $0xe8] sm:$0xff]
        %v436 = vld [vmem:[%s342 + $0xf0] sm:$0xff]
        %v437 = vld [vmem:[%s342 + $0xf8] sm:$0xff]
        %vm438 = vcmask 64512
        %v439 = vsel %vm438, %v406, 0.0
        %v440 = vsel %vm438, %v407, 0.0
        %v441 = vadd.f32 %v439, %v440
        %v442 = vsel %vm438, %v408, 0.0
        %v443 = vadd.f32 %v441, %v442
        %v444 = vsel %vm438, %v409, 0.0
        %v445 = vadd.f32 %v443, %v444
        %v446 = vsel %vm438, %v410, 0.0
        %v447 = vadd.f32 %v445, %v446
        %v448 = vsel %vm438, %v411, 0.0
        %v449 = vadd.f32 %v447, %v448
        %v450 = vsel %vm438, %v412, 0.0
        %v451 = vadd.f32 %v449, %v450
        %v452 = vsel %vm438, %v413, 0.0
        %v453 = vadd.f32 %v451, %v452
        %v454 = vsel %vm438, %v414, 0.0
        %v455 = vadd.f32 %v453, %v454
        %v456 = vsel %vm438, %v415, 0.0
        %v457 = vadd.f32 %v455, %v456
        %v458 = vsel %vm438, %v416, 0.0
        %v459 = vadd.f32 %v457, %v458
        %v460 = vsel %vm438, %v417, 0.0
        %v461 = vadd.f32 %v459, %v460
        %v462 = vsel %vm438, %v418, 0.0
        %v463 = vadd.f32 %v461, %v462
        %v464 = vsel %vm438, %v419, 0.0
        %v465 = vadd.f32 %v463, %v464
        %v466 = vsel %vm438, %v420, 0.0
        %v467 = vadd.f32 %v465, %v466
        %v468 = vsel %vm438, %v421, 0.0
        %v469 = vadd.f32 %v467, %v468
        %v470 = vsel %vm438, %v422, 0.0
        %v471 = vadd.f32 %v469, %v470
        %v472 = vsel %vm438, %v423, 0.0
        %v473 = vadd.f32 %v471, %v472
        %v474 = vsel %vm438, %v424, 0.0
        %v475 = vadd.f32 %v473, %v474
        %v476 = vsel %vm438, %v425, 0.0
        %v477 = vadd.f32 %v475, %v476
        %v478 = vsel %vm438, %v426, 0.0
        %v479 = vadd.f32 %v477, %v478
        %v480 = vsel %vm438, %v427, 0.0
        %v481 = vadd.f32 %v479, %v480
        %v482 = vsel %vm438, %v428, 0.0
        %v483 = vadd.f32 %v481, %v482
        %v484 = vsel %vm438, %v429, 0.0
        %v485 = vadd.f32 %v483, %v484
        %v486 = vsel %vm438, %v430, 0.0
        %v487 = vadd.f32 %v485, %v486
        %v488 = vsel %vm438, %v431, 0.0
        %v489 = vadd.f32 %v487, %v488
        %v490 = vsel %vm438, %v432, 0.0
        %v491 = vadd.f32 %v489, %v490
        %v492 = vsel %vm438, %v433, 0.0
        %v493 = vadd.f32 %v491, %v492
        %v494 = vsel %vm438, %v434, 0.0
        %v495 = vadd.f32 %v493, %v494
        %v496 = vsel %vm438, %v435, 0.0
        %v497 = vadd.f32 %v495, %v496
        %v498 = vsel %vm438, %v436, 0.0
        %v499 = vadd.f32 %v497, %v498
        %v500 = vsel %vm438, %v437, 0.0
        %v501 = vadd.f32 %v499, %v500
        %v502 = vrot.slane %v501, 4
        %v503 = vadd.f32 %v501, %v502
        %v504 = vrot.slane %v503, 2
        %v505 = vadd.f32 %v503, %v504
        %v506 = vrot.slane %v505, 1
        %v507 = vadd.f32 %v505, %v506
        %v508 = vmul.f32 %v406, %v406
        %v509 = vmul.f32 %v407, %v407
        %v510 = vmul.f32 %v408, %v408
        %v511 = vmul.f32 %v409, %v409
        %v512 = vmul.f32 %v410, %v410
        %v513 = vmul.f32 %v411, %v411
        %v514 = vmul.f32 %v412, %v412
        %v515 = vmul.f32 %v413, %v413
        %v516 = vmul.f32 %v414, %v414
        %v517 = vmul.f32 %v415, %v415
        %v518 = vmul.f32 %v416, %v416
        %v519 = vmul.f32 %v417, %v417
        %v520 = vmul.f32 %v418, %v418
        %v521 = vmul.f32 %v419, %v419
        %v522 = vmul.f32 %v420, %v420
        %v523 = vmul.f32 %v421, %v421
        %v524 = vmul.f32 %v422, %v422
        %v525 = vmul.f32 %v423, %v423
        %v526 = vmul.f32 %v424, %v424
        %v527 = vmul.f32 %v425, %v425
        %v528 = vmul.f32 %v426, %v426
        %v529 = vmul.f32 %v427, %v427
        %v530 = vmul.f32 %v428, %v428
        %v531 = vmul.f32 %v429, %v429
        %v532 = vmul.f32 %v430, %v430
        %v533 = vmul.f32 %v431, %v431
        %v534 = vmul.f32 %v432, %v432
        %v535 = vmul.f32 %v433, %v433
        %v536 = vmul.f32 %v434, %v434
        %v537 = vmul.f32 %v435, %v435
        %v538 = vmul.f32 %v436, %v436
        %v539 = vmul.f32 %v437, %v437
        %v540 = vsel %vm438, %v508, 0.0
        %v541 = vsel %vm438, %v509, 0.0
        %v542 = vadd.f32 %v540, %v541
        %v543 = vsel %vm438, %v510, 0.0
        %v544 = vadd.f32 %v542, %v543
        %v545 = vsel %vm438, %v511, 0.0
        %v546 = vadd.f32 %v544, %v545
        %v547 = vsel %vm438, %v512, 0.0
        %v548 = vadd.f32 %v546, %v547
        %v549 = vsel %vm438, %v513, 0.0
        %v550 = vadd.f32 %v548, %v549
        %v551 = vsel %vm438, %v514, 0.0
        %v552 = vadd.f32 %v550, %v551
        %v553 = vsel %vm438, %v515, 0.0
        %v554 = vadd.f32 %v552, %v553
        %v555 = vsel %vm438, %v516, 0.0
        %v556 = vadd.f32 %v554, %v555
        %v557 = vsel %vm438, %v517, 0.0
        %v558 = vadd.f32 %v556, %v557
        %v559 = vsel %vm438, %v518, 0.0
        %v560 = vadd.f32 %v558, %v559
        %v561 = vsel %vm438, %v519, 0.0
        %v562 = vadd.f32 %v560, %v561
        %v563 = vsel %vm438, %v520, 0.0
        %v564 = vadd.f32 %v562, %v563
        %v565 = vsel %vm438, %v521, 0.0
        %v566 = vadd.f32 %v564, %v565
        %v567 = vsel %vm438, %v522, 0.0
        %v568 = vadd.f32 %v566, %v567
        %v569 = vsel %vm438, %v523, 0.0
        %v570 = vadd.f32 %v568, %v569
        %v571 = vsel %vm438, %v524, 0.0
        %v572 = vadd.f32 %v570, %v571
        %v573 = vsel %vm438, %v525, 0.0
        %v574 = vadd.f32 %v572, %v573
        %v575 = vsel %vm438, %v526, 0.0
        %v576 = vadd.f32 %v574, %v575
        %v577 = vsel %vm438, %v527, 0.0
        %v578 = vadd.f32 %v576, %v577
        %v579 = vsel %vm438, %v528, 0.0
        %v580 = vadd.f32 %v578, %v579
        %v581 = vsel %vm438, %v529, 0.0
        %v582 = vadd.f32 %v580, %v581
        %v583 = vsel %vm438, %v530, 0.0
        %v584 = vadd.f32 %v582, %v583
        %v585 = vsel %vm438, %v531, 0.0
        %v586 = vadd.f32 %v584, %v585
        %v587 = vsel %vm438, %v532, 0.0
        %v588 = vadd.f32 %v586, %v587
        %v589 = vsel %vm438, %v533, 0.0
        %v590 = vadd.f32 %v588, %v589
        %v591 = vsel %vm438, %v534, 0.0
        %v592 = vadd.f32 %v590, %v591
        %v593 = vsel %vm438, %v535, 0.0
        %v594 = vadd.f32 %v592, %v593
        %v595 = vsel %vm438, %v536, 0.0
        %v596 = vadd.f32 %v594, %v595
        %v597 = vsel %vm438, %v537, 0.0
        %v598 = vadd.f32 %v596, %v597
        %v599 = vsel %vm438, %v538, 0.0
        %v600 = vadd.f32 %v598, %v599
        %v601 = vsel %vm438, %v539, 0.0
        %v602 = vadd.f32 %v600, %v601
        %v603 = vrot.slane %v602, 4
        %v604 = vadd.f32 %v602, %v603
        %v605 = vrot.slane %v604, 2
        %v606 = vadd.f32 %v604, %v605
        %v607 = vrot.slane %v606, 1
        %v608 = vadd.f32 %v606, %v607
        %v609 = vld [vmem:[#allocation8] sm:$0xff]
        %v611 = vsel %vm438, %v507, 0
        %613 = vmatprep.subr.mxu0 0.0
        %614 = vmatpush1.msra.mxu0 %v609
        %615 = vmatprep.subr.mxu0 0.0
        %616 = vmatpush1.msra.mxu0 0.0
        %617 = vmatprep.subr.mxu0 0.0
        %618 = vmatpush1.msra.mxu0 0.0
        %619 = vmatprep.subr.mxu0 0.0
        %620 = vmatpush1.msra.mxu0 0.0
        %621 = vmatprep.subr.mxu0 0.0
        %622 = vmatpush1.msra.mxu0 0.0
        %623 = vmatprep.subr.mxu0 0.0
        %624 = vmatpush1.msra.mxu0 0.0
        %625 = vmatprep.subr.mxu0 0.0
        %626 = vmatpush1.msra.mxu0 0.0
        %627 = vmatprep.subr.mxu0 0.0
        %628 = vmatpush1.msra.mxu0 0.0
        %629 = vmatprep.subr.mxu0 0.0
        %630 = vmatpush1.msra.mxu0 0.0
        %631 = vmatprep.subr.mxu0 0.0
        %632 = vmatpush1.msra.mxu0 0.0
        %633 = vmatprep.subr.mxu0 0.0
        %634 = vmatpush1.msra.mxu0 0.0
        %635 = vmatprep.subr.mxu0 0.0
        %636 = vmatpush1.msra.mxu0 0.0
        %637 = vmatprep.subr.mxu0 0.0
        %638 = vmatpush1.msra.mxu0 0.0
        %639 = vmatprep.subr.mxu0 0.0
        %640 = vmatpush1.msra.mxu0 0.0
        %641 = vmatprep.subr.mxu0 0.0
        %642 = vmatpush1.msra.mxu0 0.0
        %643 = vmatprep.subr.mxu0 0.0
        %644 = vmatpush1.msra.mxu0 0.0
        %645 = vmatprep.subr.mxu0 0.0
        %646 = vmatpush1.msra.mxu0 0.0
        %647 = vmatprep.subr.mxu0 0.0
        %648 = vmatpush1.msra.mxu0 0.0
        %649 = vmatprep.subr.mxu0 0.0
        %650 = vmatpush1.msra.mxu0 0.0
        %651 = vmatprep.subr.mxu0 0.0
        %652 = vmatpush1.msra.mxu0 0.0
        %653 = vmatprep.subr.mxu0 0.0
        %654 = vmatpush1.msra.mxu0 0.0
        %655 = vmatprep.subr.mxu0 0.0
        %656 = vmatpush1.msra.mxu0 0.0
        %657 = vmatprep.subr.mxu0 0.0
        %658 = vmatpush1.msra.mxu0 0.0
        %659 = vmatprep.subr.mxu0 0.0
        %660 = vmatpush1.msra.mxu0 0.0
        %661 = vmatprep.subr.mxu0 0.0
        %662 = vmatpush1.msra.mxu0 0.0
        %663 = vmatprep.subr.mxu0 0.0
        %664 = vmatpush1.msra.mxu0 0.0
        %665 = vmatprep.subr.mxu0 0.0
        %666 = vmatpush1.msra.mxu0 0.0
        %667 = vmatprep.subr.mxu0 0.0
        %668 = vmatpush1.msra.mxu0 0.0
        %669 = vmatprep.subr.mxu0 0.0
        %670 = vmatpush1.msra.mxu0 0.0
        %671 = vmatprep.subr.mxu0 0.0
        %672 = vmatpush1.msra.mxu0 0.0
        %673 = vmatprep.subr.mxu0 0.0
        %674 = vmatpush1.msra.mxu0 0.0
        %675 = vmatprep.subr.mxu0 0.0
        %676 = vmatpush1.msra.mxu0 0.0
        %677 = vmatprep.mubr.f32.mxu0 0.0
        %678 = vmatmul.mubr.f32.gmra.mrb[0].mxu0 %v611
        %v679 = vpop.f32.mrb[0].mxu0
        %v680 = vadd.f32 0.0, %v679
        %v681 = vpop.f32.mrb[0].mxu0
        %682 = vdwg.mxu0
        %v683 = vrcp.pop 512.0
        %v684 = vmul.f32 %v680, %v683
        %v686 = vsel %vm438, %v608, 0
        %688 = vmatprep.subr.mxu0 0.0
        %689 = vmatpush1.msra.mxu0 %v609
        %690 = vmatprep.subr.mxu0 0.0
        %691 = vmatpush1.msra.mxu0 0.0
        %692 = vmatprep.subr.mxu0 0.0
        %693 = vmatpush1.msra.mxu0 0.0
        %694 = vmatprep.subr.mxu0 0.0
        %695 = vmatpush1.msra.mxu0 0.0
        %696 = vmatprep.subr.mxu0 0.0
        %697 = vmatpush1.msra.mxu0 0.0
        %698 = vmatprep.subr.mxu0 0.0
        %699 = vmatpush1.msra.mxu0 0.0
        %700 = vmatprep.subr.mxu0 0.0
        %701 = vmatpush1.msra.mxu0 0.0
        %702 = vmatprep.subr.mxu0 0.0
        %703 = vmatpush1.msra.mxu0 0.0
        %704 = vmatprep.subr.mxu0 0.0
        %705 = vmatpush1.msra.mxu0 0.0
        %706 = vmatprep.subr.mxu0 0.0
        %707 = vmatpush1.msra.mxu0 0.0
        %708 = vmatprep.subr.mxu0 0.0
        %709 = vmatpush1.msra.mxu0 0.0
        %710 = vmatprep.subr.mxu0 0.0
        %711 = vmatpush1.msra.mxu0 0.0
        %712 = vmatprep.subr.mxu0 0.0
        %713 = vmatpush1.msra.mxu0 0.0
        %714 = vmatprep.subr.mxu0 0.0
        %715 = vmatpush1.msra.mxu0 0.0
        %716 = vmatprep.subr.mxu0 0.0
        %717 = vmatpush1.msra.mxu0 0.0
        %718 = vmatprep.subr.mxu0 0.0
        %719 = vmatpush1.msra.mxu0 0.0
        %720 = vmatprep.subr.mxu0 0.0
        %721 = vmatpush1.msra.mxu0 0.0
        %722 = vmatprep.subr.mxu0 0.0
        %723 = vmatpush1.msra.mxu0 0.0
        %724 = vmatprep.subr.mxu0 0.0
        %725 = vmatpush1.msra.mxu0 0.0
        %726 = vmatprep.subr.mxu0 0.0
        %727 = vmatpush1.msra.mxu0 0.0
        %728 = vmatprep.subr.mxu0 0.0
        %729 = vmatpush1.msra.mxu0 0.0
        %730 = vmatprep.subr.mxu0 0.0
        %731 = vmatpush1.msra.mxu0 0.0
        %732 = vmatprep.subr.mxu0 0.0
        %733 = vmatpush1.msra.mxu0 0.0
        %734 = vmatprep.subr.mxu0 0.0
        %735 = vmatpush1.msra.mxu0 0.0
        %736 = vmatprep.subr.mxu0 0.0
        %737 = vmatpush1.msra.mxu0 0.0
        %738 = vmatprep.subr.mxu0 0.0
        %739 = vmatpush1.msra.mxu0 0.0
        %740 = vmatprep.subr.mxu0 0.0
        %741 = vmatpush1.msra.mxu0 0.0
        %742 = vmatprep.subr.mxu0 0.0
        %743 = vmatpush1.msra.mxu0 0.0
        %744 = vmatprep.subr.mxu0 0.0
        %745 = vmatpush1.msra.mxu0 0.0
        %746 = vmatprep.subr.mxu0 0.0
        %747 = vmatpush1.msra.mxu0 0.0
        %748 = vmatprep.subr.mxu0 0.0
        %749 = vmatpush1.msra.mxu0 0.0
        %750 = vmatprep.subr.mxu0 0.0
        %751 = vmatpush1.msra.mxu0 0.0
        %752 = vmatprep.mubr.f32.mxu0 0.0
        %753 = vmatmul.mubr.f32.gmra.mrb[0].mxu0 %v686
        %v754 = vpop.f32.mrb[0].mxu0
        %v755 = vadd.f32 0.0, %v754
        %v756 = vpop.f32.mrb[0].mxu0
        %757 = vdwg.mxu0
        %v758 = vmul.f32 %v755, %v683
        %v759 = vmul.f32 %v684, %v684
        %v760 = vsub.f32 %v758, %v759
        %v761 = vld [vmem:[#allocation10] sm:$0xf]
        %vm762 = vcmask 31744
        %v764 = vsel %vm762, %v684, 0
        %vm766 = vcmask 1043456
        %v768 = vsel %vm766, %v761, 0
        %770 = vmatprep.subr.mxu0 0.0
        %771 = vmatpush1.msra.mxu0 %v768
        %772 = vmatprep.subr.mxu0 0.0
        %773 = vmatpush1.msra.mxu0 0.0
        %774 = vmatprep.subr.mxu0 0.0
        %775 = vmatpush1.msra.mxu0 0.0
        %776 = vmatprep.subr.mxu0 0.0
        %777 = vmatpush1.msra.mxu0 0.0
        %778 = vmatprep.subr.mxu0 0.0
        %779 = vmatpush1.msra.mxu0 0.0
        %780 = vmatprep.subr.mxu0 0.0
        %781 = vmatpush1.msra.mxu0 0.0
        %782 = vmatprep.subr.mxu0 0.0
        %783 = vmatpush1.msra.mxu0 0.0
        %784 = vmatprep.subr.mxu0 0.0
        %785 = vmatpush1.msra.mxu0 0.0
        %786 = vmatprep.subr.mxu0 0.0
        %787 = vmatpush1.msra.mxu0 0.0
        %788 = vmatprep.subr.mxu0 0.0
        %789 = vmatpush1.msra.mxu0 0.0
        %790 = vmatprep.subr.mxu0 0.0
        %791 = vmatpush1.msra.mxu0 0.0
        %792 = vmatprep.subr.mxu0 0.0
        %793 = vmatpush1.msra.mxu0 0.0
        %794 = vmatprep.subr.mxu0 0.0
        %795 = vmatpush1.msra.mxu0 0.0
        %796 = vmatprep.subr.mxu0 0.0
        %797 = vmatpush1.msra.mxu0 0.0
        %798 = vmatprep.subr.mxu0 0.0
        %799 = vmatpush1.msra.mxu0 0.0
        %800 = vmatprep.subr.mxu0 0.0
        %801 = vmatpush1.msra.mxu0 0.0
        %802 = vmatprep.subr.mxu0 0.0
        %803 = vmatpush1.msra.mxu0 0.0
        %804 = vmatprep.subr.mxu0 0.0
        %805 = vmatpush1.msra.mxu0 0.0
        %806 = vmatprep.subr.mxu0 0.0
        %807 = vmatpush1.msra.mxu0 0.0
        %808 = vmatprep.subr.mxu0 0.0
        %809 = vmatpush1.msra.mxu0 0.0
        %810 = vmatprep.subr.mxu0 0.0
        %811 = vmatpush1.msra.mxu0 0.0
        %812 = vmatprep.subr.mxu0 0.0
        %813 = vmatpush1.msra.mxu0 0.0
        %814 = vmatprep.subr.mxu0 0.0
        %815 = vmatpush1.msra.mxu0 0.0
        %816 = vmatprep.subr.mxu0 0.0
        %817 = vmatpush1.msra.mxu0 0.0
        %818 = vmatprep.subr.mxu0 0.0
        %819 = vmatpush1.msra.mxu0 0.0
        %820 = vmatprep.subr.mxu0 0.0
        %821 = vmatpush1.msra.mxu0 0.0
        %822 = vmatprep.subr.mxu0 0.0
        %823 = vmatpush1.msra.mxu0 0.0
        %824 = vmatprep.subr.mxu0 0.0
        %825 = vmatpush1.msra.mxu0 0.0
        %826 = vmatprep.subr.mxu0 0.0
        %827 = vmatpush1.msra.mxu0 0.0
        %828 = vmatprep.subr.mxu0 0.0
        %829 = vmatpush1.msra.mxu0 0.0
        %830 = vmatprep.subr.mxu0 0.0
        %831 = vmatpush1.msra.mxu0 0.0
        %832 = vmatprep.subr.mxu0 0.0
        %833 = vmatpush1.msra.mxu0 0.0
        %834 = vmatprep.mubr.f32.mxu0 0.0
        %835 = vmatmul.mubr.f32.gmra.mrb[0].mxu0 %v764
        %v836 = vpop.f32.mrb[0].mxu0
        %v837 = vadd.f32 0.0, %v836
        %v838 = vpop.f32.mrb[0].mxu0
        %839 = vdwg.mxu0
        %v840 = vlaneseq
        %v841 = vshrl.u32 %v840, 7
        %v842 = vsub.s32 0, %v841
        %v843 = vrot.slane %v837, %v842
        %v844 = vsub.f32 %v406, %v843
        %v845 = vsub.f32 %v407, %v843
        %v846 = vsub.f32 %v408, %v843
        %v847 = vsub.f32 %v409, %v843
        %v848 = vsub.f32 %v410, %v843
        %v849 = vsub.f32 %v411, %v843
        %v850 = vsub.f32 %v412, %v843
        %v851 = vsub.f32 %v413, %v843
        %v852 = vsub.f32 %v414, %v843
        %v853 = vsub.f32 %v415, %v843
        %v854 = vsub.f32 %v416, %v843
        %v855 = vsub.f32 %v417, %v843
        %v856 = vsub.f32 %v418, %v843
        %v857 = vsub.f32 %v419, %v843
        %v858 = vsub.f32 %v420, %v843
        %v859 = vsub.f32 %v421, %v843
        %v860 = vsub.f32 %v422, %v843
        %v861 = vsub.f32 %v423, %v843
        %v862 = vsub.f32 %v424, %v843
        %v863 = vsub.f32 %v425, %v843
        %v864 = vsub.f32 %v426, %v843
        %v865 = vsub.f32 %v427, %v843
        %v866 = vsub.f32 %v428, %v843
        %v867 = vsub.f32 %v429, %v843
        %v868 = vsub.f32 %v430, %v843
        %v869 = vsub.f32 %v431, %v843
        %v870 = vsub.f32 %v432, %v843
        %v871 = vsub.f32 %v433, %v843
        %v872 = vsub.f32 %v434, %v843
        %v873 = vsub.f32 %v435, %v843
        %v874 = vsub.f32 %v436, %v843
        %v875 = vsub.f32 %v437, %v843
        %v877 = vsel %vm762, %v760, 0
        %879 = vmatprep.subr.mxu0 0.0
        %880 = vmatpush1.msra.mxu0 %v768
        %881 = vmatprep.subr.mxu0 0.0
        %882 = vmatpush1.msra.mxu0 0.0
        %883 = vmatprep.subr.mxu0 0.0
        %884 = vmatpush1.msra.mxu0 0.0
        %885 = vmatprep.subr.mxu0 0.0
        %886 = vmatpush1.msra.mxu0 0.0
        %887 = vmatprep.subr.mxu0 0.0
        %888 = vmatpush1.msra.mxu0 0.0
        %889 = vmatprep.subr.mxu0 0.0
        %890 = vmatpush1.msra.mxu0 0.0
        %891 = vmatprep.subr.mxu0 0.0
        %892 = vmatpush1.msra.mxu0 0.0
        %893 = vmatprep.subr.mxu0 0.0
        %894 = vmatpush1.msra.mxu0 0.0
        %895 = vmatprep.subr.mxu0 0.0
        %896 = vmatpush1.msra.mxu0 0.0
        %897 = vmatprep.subr.mxu0 0.0
        %898 = vmatpush1.msra.mxu0 0.0
        %899 = vmatprep.subr.mxu0 0.0
        %900 = vmatpush1.msra.mxu0 0.0
        %901 = vmatprep.subr.mxu0 0.0
        %902 = vmatpush1.msra.mxu0 0.0
        %903 = vmatprep.subr.mxu0 0.0
        %904 = vmatpush1.msra.mxu0 0.0
        %905 = vmatprep.subr.mxu0 0.0
        %906 = vmatpush1.msra.mxu0 0.0
        %907 = vmatprep.subr.mxu0 0.0
        %908 = vmatpush1.msra.mxu0 0.0
        %909 = vmatprep.subr.mxu0 0.0
        %910 = vmatpush1.msra.mxu0 0.0
        %911 = vmatprep.subr.mxu0 0.0
        %912 = vmatpush1.msra.mxu0 0.0
        %913 = vmatprep.subr.mxu0 0.0
        %914 = vmatpush1.msra.mxu0 0.0
        %915 = vmatprep.subr.mxu0 0.0
        %916 = vmatpush1.msra.mxu0 0.0
        %917 = vmatprep.subr.mxu0 0.0
        %918 = vmatpush1.msra.mxu0 0.0
        %919 = vmatprep.subr.mxu0 0.0
        %920 = vmatpush1.msra.mxu0 0.0
        %921 = vmatprep.subr.mxu0 0.0
        %922 = vmatpush1.msra.mxu0 0.0
        %923 = vmatprep.subr.mxu0 0.0
        %924 = vmatpush1.msra.mxu0 0.0
        %925 = vmatprep.subr.mxu0 0.0
        %926 = vmatpush1.msra.mxu0 0.0
        %927 = vmatprep.subr.mxu0 0.0
        %928 = vmatpush1.msra.mxu0 0.0
        %929 = vmatprep.subr.mxu0 0.0
        %930 = vmatpush1.msra.mxu0 0.0
        %931 = vmatprep.subr.mxu0 0.0
        %932 = vmatpush1.msra.mxu0 0.0
        %933 = vmatprep.subr.mxu0 0.0
        %934 = vmatpush1.msra.mxu0 0.0
        %935 = vmatprep.subr.mxu0 0.0
        %936 = vmatpush1.msra.mxu0 0.0
        %937 = vmatprep.subr.mxu0 0.0
        %938 = vmatpush1.msra.mxu0 0.0
        %939 = vmatprep.subr.mxu0 0.0
        %940 = vmatpush1.msra.mxu0 0.0
        %941 = vmatprep.subr.mxu0 0.0
        %942 = vmatpush1.msra.mxu0 0.0
        %943 = vmatprep.mubr.f32.mxu0 0.0
        %944 = vmatmul.mubr.f32.gmra.mrb[0].mxu0 %v877
        %v945 = vpop.f32.mrb[0].mxu0
        %v946 = vadd.f32 1e-05, %v945
        %v947 = vpop.f32.mrb[0].mxu0
        %948 = vdwg.mxu0
        %v949 = vrsqrt.pop %v946
        %v950 = vlaneseq
        %v951 = vshrl.u32 %v950, 7
        %v952 = vsub.s32 0, %v951
        %v953 = vrot.slane %v949, %v952
        %v954 = vmul.f32 %v844, %v953
        %v955 = vmul.f32 %v845, %v953
        %v956 = vmul.f32 %v846, %v953
        %v957 = vmul.f32 %v847, %v953
        %v958 = vmul.f32 %v848, %v953
        %v959 = vmul.f32 %v849, %v953
        %v960 = vmul.f32 %v850, %v953
        %v961 = vmul.f32 %v851, %v953
        %v962 = vmul.f32 %v852, %v953
        %v963 = vmul.f32 %v853, %v953
        %v964 = vmul.f32 %v854, %v953
        %v965 = vmul.f32 %v855, %v953
        %v966 = vmul.f32 %v856, %v953
        %v967 = vmul.f32 %v857, %v953
        %v968 = vmul.f32 %v858, %v953
        %v969 = vmul.f32 %v859, %v953
        %v970 = vmul.f32 %v860, %v953
        %v971 = vmul.f32 %v861, %v953
        %v972 = vmul.f32 %v862, %v953
        %v973 = vmul.f32 %v863, %v953
        %v974 = vmul.f32 %v864, %v953
        %v975 = vmul.f32 %v865, %v953
        %v976 = vmul.f32 %v866, %v953
        %v977 = vmul.f32 %v867, %v953
        %v978 = vmul.f32 %v868, %v953
        %v979 = vmul.f32 %v869, %v953
        %v980 = vmul.f32 %v870, %v953
        %v981 = vmul.f32 %v871, %v953
        %v982 = vmul.f32 %v872, %v953
        %v983 = vmul.f32 %v873, %v953
        %v984 = vmul.f32 %v874, %v953
        %v985 = vmul.f32 %v875, %v953
        %v986 = vld [vmem:[#allocation5] sm:$0x1]
        %v988 = vlaneseq
        %v989 = vshrl.u32 %v988, 7
        %v990 = vsub.s32 0, %v989
        %v991 = vrot.slane %v986, %v990
        %v993 = vmul.f32 %v954, %v991
        %v994 = vmul.f32 %v955, %v991
        %v995 = vmul.f32 %v956, %v991
        %v996 = vmul.f32 %v957, %v991
        %v997 = vmul.f32 %v958, %v991
        %v998 = vmul.f32 %v959, %v991
        %v999 = vmul.f32 %v960, %v991
        %v1000 = vmul.f32 %v961, %v991
        %v1001 = vmul.f32 %v962, %v991
        %v1002 = vmul.f32 %v963, %v991
        %v1003 = vmul.f32 %v964, %v991
        %v1004 = vmul.f32 %v965, %v991
        %v1005 = vmul.f32 %v966, %v991
        %v1006 = vmul.f32 %v967, %v991
        %v1007 = vmul.f32 %v968, %v991
        %v1008 = vmul.f32 %v969, %v991
        %v1009 = vmul.f32 %v970, %v991
        %v1010 = vmul.f32 %v971, %v991
        %v1011 = vmul.f32 %v972, %v991
        %v1012 = vmul.f32 %v973, %v991
        %v1013 = vmul.f32 %v974, %v991
        %v1014 = vmul.f32 %v975, %v991
        %v1015 = vmul.f32 %v976, %v991
        %v1016 = vmul.f32 %v977, %v991
        %v1017 = vmul.f32 %v978, %v991
        %v1018 = vmul.f32 %v979, %v991
        %v1019 = vmul.f32 %v980, %v991
        %v1020 = vmul.f32 %v981, %v991
        %v1021 = vmul.f32 %v982, %v991
        %v1022 = vmul.f32 %v983, %v991
        %v1023 = vmul.f32 %v984, %v991
        %v1024 = vmul.f32 %v985, %v991
        %v1025 = vld [vmem:[#allocation7] sm:$0x1]
        %v1027 = vlaneseq
        %v1028 = vshrl.u32 %v1027, 7
        %v1029 = vsub.s32 0, %v1028
        %v1030 = vrot.slane %v1025, %v1029
        %v1032 = vadd.f32 %v993, %v1030
        %v1033 = vadd.f32 %v994, %v1030
        %v1034 = vadd.f32 %v995, %v1030
        %v1035 = vadd.f32 %v996, %v1030
        %v1036 = vadd.f32 %v997, %v1030
        %v1037 = vadd.f32 %v998, %v1030
        %v1038 = vadd.f32 %v999, %v1030
        %v1039 = vadd.f32 %v1000, %v1030
        %v1040 = vadd.f32 %v1001, %v1030
        %v1041 = vadd.f32 %v1002, %v1030
        %v1042 = vadd.f32 %v1003, %v1030
        %v1043 = vadd.f32 %v1004, %v1030
        %v1044 = vadd.f32 %v1005, %v1030
        %v1045 = vadd.f32 %v1006, %v1030
        %v1046 = vadd.f32 %v1007, %v1030
        %v1047 = vadd.f32 %v1008, %v1030
        %v1048 = vadd.f32 %v1009, %v1030
        %v1049 = vadd.f32 %v1010, %v1030
        %v1050 = vadd.f32 %v1011, %v1030
        %v1051 = vadd.f32 %v1012, %v1030
        %v1052 = vadd.f32 %v1013, %v1030
        %v1053 = vadd.f32 %v1014, %v1030
        %v1054 = vadd.f32 %v1015, %v1030
        %v1055 = vadd.f32 %v1016, %v1030
        %v1056 = vadd.f32 %v1017, %v1030
        %v1057 = vadd.f32 %v1018, %v1030
        %v1058 = vadd.f32 %v1019, %v1030
        %v1059 = vadd.f32 %v1020, %v1030
        %v1060 = vadd.f32 %v1021, %v1030
        %v1061 = vadd.f32 %v1022, %v1030
        %v1062 = vadd.f32 %v1023, %v1030
        %v1063 = vadd.f32 %v1024, %v1030
        %v1064 = vpack.c.bf16 %v1033, %v1032
        %v1065 = vpack.c.bf16 %v1035, %v1034
        %v1066 = vpack.c.bf16 %v1037, %v1036
        %v1067 = vpack.c.bf16 %v1039, %v1038
        %v1068 = vpack.c.bf16 %v1041, %v1040
        %v1069 = vpack.c.bf16 %v1043, %v1042
        %v1070 = vpack.c.bf16 %v1045, %v1044
        %v1071 = vpack.c.bf16 %v1047, %v1046
        %v1072 = vpack.c.bf16 %v1049, %v1048
        %v1073 = vpack.c.bf16 %v1051, %v1050
        %v1074 = vpack.c.bf16 %v1053, %v1052
        %v1075 = vpack.c.bf16 %v1055, %v1054
        %v1076 = vpack.c.bf16 %v1057, %v1056
        %v1077 = vpack.c.bf16 %v1059, %v1058
        %v1078 = vpack.c.bf16 %v1061, %v1060
        %v1079 = vpack.c.bf16 %v1063, %v1062
        %v1080 = vld [vmem:[#allocation11] sm:$0xf]
        %v1082 = vsel %vm438, %v1064, 0
        %v1085 = vsel %vm438, %v1065, 0
        %v1088 = vsel %vm438, %v1066, 0
        %v1091 = vsel %vm438, %v1067, 0
        %v1094 = vsel %vm438, %v1068, 0
        %v1097 = vsel %vm438, %v1069, 0
        %v1100 = vsel %vm438, %v1070, 0
        %v1103 = vsel %vm438, %v1071, 0
        %v1106 = vsel %vm438, %v1072, 0
        %v1109 = vsel %vm438, %v1073, 0
        %v1112 = vsel %vm438, %v1074, 0
        %v1115 = vsel %vm438, %v1075, 0
        %v1118 = vsel %vm438, %v1076, 0
        %v1121 = vsel %vm438, %v1077, 0
        %v1124 = vsel %vm438, %v1078, 0
        %v1127 = vsel %vm438, %v1079, 0
        %v1130 = vsel %vm766, %v1080, 0
        %1132 = vmatprep.subr.bf16.mxu0 0
        %1133 = vmatpush1.bf16.msra.mxu0 %v1130
        %1134 = vmatprep.subr.bf16.mxu0 0
        %1135 = vmatpush1.bf16.msra.mxu0 0
        %1136 = vmatprep.subr.bf16.mxu0 0
        %1137 = vmatpush1.bf16.msra.mxu0 0
        %1138 = vmatprep.subr.bf16.mxu0 0
        %1139 = vmatpush1.bf16.msra.mxu0 0
        %1140 = vmatprep.subr.bf16.mxu0 0
        %1141 = vmatpush1.bf16.msra.mxu0 0
        %1142 = vmatprep.subr.bf16.mxu0 0
        %1143 = vmatpush1.bf16.msra.mxu0 0
        %1144 = vmatprep.subr.bf16.mxu0 0
        %1145 = vmatpush1.bf16.msra.mxu0 0
        %1146 = vmatprep.subr.bf16.mxu0 0
        %1147 = vmatpush1.bf16.msra.mxu0 0
        %1148 = vmatprep.subr.bf16.mxu0 0
        %1149 = vmatpush1.bf16.msra.mxu0 0
        %1150 = vmatprep.subr.bf16.mxu0 0
        %1151 = vmatpush1.bf16.msra.mxu0 0
        %1152 = vmatprep.subr.bf16.mxu0 0
        %1153 = vmatpush1.bf16.msra.mxu0 0
        %1154 = vmatprep.subr.bf16.mxu0 0
        %1155 = vmatpush1.bf16.msra.mxu0 0
        %1156 = vmatprep.subr.bf16.mxu0 0
        %1157 = vmatpush1.bf16.msra.mxu0 0
        %1158 = vmatprep.subr.bf16.mxu0 0
        %1159 = vmatpush1.bf16.msra.mxu0 0
        %1160 = vmatprep.subr.bf16.mxu0 0
        %1161 = vmatpush1.bf16.msra.mxu0 0
        %1162 = vmatprep.subr.bf16.mxu0 0
        %1163 = vmatpush1.bf16.msra.mxu0 0
        %1164 = vmatprep.mubr.bf16.mxu0 0
        %1165 = vmatmul.mubr.bf16.gmra.mrb[0].mxu0 %v1082
        %v1166 = vpop.f32.mrb[0].mxu0
        %v1167 = vadd.f32 0.0, %v1166
        %v1168 = vpop.f32.mrb[0].mxu0
        %v1169 = vpop.f32.mrb[0].mxu0
        %v1170 = vadd.f32 0.0, %v1169
        %v1171 = vpop.f32.mrb[0].mxu0
        %1172 = vmatprep.mubr.bf16.mxu0 0
        %1173 = vmatmul.mubr.bf16.gmra.mrb[0].mxu0 %v1085
        %v1174 = vpop.f32.mrb[0].mxu0
        %v1175 = vadd.f32 0.0, %v1174
        %v1176 = vpop.f32.mrb[0].mxu0
        %v1177 = vpop.f32.mrb[0].mxu0
        %v1178 = vadd.f32 0.0, %v1177
        %v1179 = vpop.f32.mrb[0].mxu0
        %1180 = vmatprep.mubr.bf16.mxu0 0
        %1181 = vmatmul.mubr.bf16.gmra.mrb[0].mxu0 %v1088
        %v1182 = vpop.f32.mrb[0].mxu0
        %v1183 = vadd.f32 0.0, %v1182
        %v1184 = vpop.f32.mrb[0].mxu0
        %v1185 = vpop.f32.mrb[0].mxu0
        %v1186 = vadd.f32 0.0, %v1185
        %v1187 = vpop.f32.mrb[0].mxu0
        %1188 = vmatprep.mubr.bf16.mxu0 0
        %1189 = vmatmul.mubr.bf16.gmra.mrb[0].mxu0 %v1091
        %v1190 = vpop.f32.mrb[0].mxu0
        %v1191 = vadd.f32 0.0, %v1190
        %v1192 = vpop.f32.mrb[0].mxu0
        %v1193 = vpop.f32.mrb[0].mxu0
        %v1194 = vadd.f32 0.0, %v1193
        %v1195 = vpop.f32.mrb[0].mxu0
        %1196 = vmatprep.mubr.bf16.mxu0 0
        %1197 = vmatmul.mubr.bf16.gmra.mrb[0].mxu0 %v1094
        %v1198 = vpop.f32.mrb[0].mxu0
        %v1199 = vadd.f32 0.0, %v1198
        %v1200 = vpop.f32.mrb[0].mxu0
        %v1201 = vpop.f32.mrb[0].mxu0
        %v1202 = vadd.f32 0.0, %v1201
        %v1203 = vpop.f32.mrb[0].mxu0
        %1204 = vmatprep.mubr.bf16.mxu0 0
        %1205 = vmatmul.mubr.bf16.gmra.mrb[0].mxu0 %v1097
        %v1206 = vpop.f32.mrb[0].mxu0
        %v1207 = vadd.f32 0.0, %v1206
        %v1208 = vpop.f32.mrb[0].mxu0
        %v1209 = vpop.f32.mrb[0].mxu0
        %v1210 = vadd.f32 0.0, %v1209
        %v1211 = vpop.f32.mrb[0].mxu0
        %1212 = vmatprep.mubr.bf16.mxu0 0
        %1213 = vmatmul.mubr.bf16.gmra.mrb[0].mxu0 %v1100
        %v1214 = vpop.f32.mrb[0].mxu0
        %v1215 = vadd.f32 0.0, %v1214
        %v1216 = vpop.f32.mrb[0].mxu0
        %v1217 = vpop.f32.mrb[0].mxu0
        %v1218 = vadd.f32 0.0, %v1217
        %v1219 = vpop.f32.mrb[0].mxu0
        %1220 = vmatprep.mubr.bf16.mxu0 0
        %1221 = vmatmul.mubr.bf16.gmra.mrb[0].mxu0 %v1103
        %v1222 = vpop.f32.mrb[0].mxu0
        %v1223 = vadd.f32 0.0, %v1222
        %v1224 = vpop.f32.mrb[0].mxu0
        %v1225 = vpop.f32.mrb[0].mxu0
        %v1226 = vadd.f32 0.0, %v1225
        %v1227 = vpop.f32.mrb[0].mxu0
        %1228 = vmatprep.mubr.bf16.mxu0 0
        %1229 = vmatmul.mubr.bf16.gmra.mrb[0].mxu0 %v1106
        %v1230 = vpop.f32.mrb[0].mxu0
        %v1231 = vadd.f32 0.0, %v1230
        %v1232 = vpop.f32.mrb[0].mxu0
        %v1233 = vpop.f32.mrb[0].mxu0
        %v1234 = vadd.f32 0.0, %v1233
        %v1235 = vpop.f32.mrb[0].mxu0
        %1236 = vmatprep.mubr.bf16.mxu0 0
        %1237 = vmatmul.mubr.bf16.gmra.mrb[0].mxu0 %v1109
        %v1238 = vpop.f32.mrb[0].mxu0
        %v1239 = vadd.f32 0.0, %v1238
        %v1240 = vpop.f32.mrb[0].mxu0
        %v1241 = vpop.f32.mrb[0].mxu0
        %v1242 = vadd.f32 0.0, %v1241
        %v1243 = vpop.f32.mrb[0].mxu0
        %1244 = vmatprep.mubr.bf16.mxu0 0
        %1245 = vmatmul.mubr.bf16.gmra.mrb[0].mxu0 %v1112
        %v1246 = vpop.f32.mrb[0].mxu0
        %v1247 = vadd.f32 0.0, %v1246
        %v1248 = vpop.f32.mrb[0].mxu0
        %v1249 = vpop.f32.mrb[0].mxu0
        %v1250 = vadd.f32 0.0, %v1249
        %v1251 = vpop.f32.mrb[0].mxu0
        %1252 = vmatprep.mubr.bf16.mxu0 0
        %1253 = vmatmul.mubr.bf16.gmra.mrb[0].mxu0 %v1115
        %v1254 = vpop.f32.mrb[0].mxu0
        %v1255 = vadd.f32 0.0, %v1254
        %v1256 = vpop.f32.mrb[0].mxu0
        %v1257 = vpop.f32.mrb[0].mxu0
        %v1258 = vadd.f32 0.0, %v1257
        %v1259 = vpop.f32.mrb[0].mxu0
        %1260 = vmatprep.mubr.bf16.mxu0 0
        %1261 = vmatmul.mubr.bf16.gmra.mrb[0].mxu0 %v1118
        %v1262 = vpop.f32.mrb[0].mxu0
        %v1263 = vadd.f32 0.0, %v1262
        %v1264 = vpop.f32.mrb[0].mxu0
        %v1265 = vpop.f32.mrb[0].mxu0
        %v1266 = vadd.f32 0.0, %v1265
        %v1267 = vpop.f32.mrb[0].mxu0
        %1268 = vmatprep.mubr.bf16.mxu0 0
        %1269 = vmatmul.mubr.bf16.gmra.mrb[0].mxu0 %v1121
        %v1270 = vpop.f32.mrb[0].mxu0
        %v1271 = vadd.f32 0.0, %v1270
        %v1272 = vpop.f32.mrb[0].mxu0
        %v1273 = vpop.f32.mrb[0].mxu0
        %v1274 = vadd.f32 0.0, %v1273
        %v1275 = vpop.f32.mrb[0].mxu0
        %1276 = vmatprep.mubr.bf16.mxu0 0
        %1277 = vmatmul.mubr.bf16.gmra.mrb[0].mxu0 %v1124
        %v1278 = vpop.f32.mrb[0].mxu0
        %v1279 = vadd.f32 0.0, %v1278
        %v1280 = vpop.f32.mrb[0].mxu0
        %v1281 = vpop.f32.mrb[0].mxu0
        %v1282 = vadd.f32 0.0, %v1281
        %v1283 = vpop.f32.mrb[0].mxu0
        %1284 = vmatprep.mubr.bf16.mxu0 0
        %1285 = vmatmul.mubr.bf16.gmra.mrb[0].mxu0 %v1127
        %v1286 = vpop.f32.mrb[0].mxu0
        %v1287 = vadd.f32 0.0, %v1286
        %v1288 = vpop.f32.mrb[0].mxu0
        %v1289 = vpop.f32.mrb[0].mxu0
        %v1290 = vadd.f32 0.0, %v1289
        %v1291 = vpop.f32.mrb[0].mxu0
        %1292 = vdwg.mxu0
        %v1293 = vmul.f32 %v1167, 0.35355338
        %v1294 = vmul.f32 %v1170, 0.35355338
        %v1295 = vmul.f32 %v1175, 0.35355338
        %v1296 = vmul.f32 %v1178, 0.35355338
        %v1297 = vmul.f32 %v1183, 0.35355338
        %v1298 = vmul.f32 %v1186, 0.35355338
        %v1299 = vmul.f32 %v1191, 0.35355338
        %v1300 = vmul.f32 %v1194, 0.35355338
        %v1301 = vmul.f32 %v1199, 0.35355338
        %v1302 = vmul.f32 %v1202, 0.35355338
        %v1303 = vmul.f32 %v1207, 0.35355338
        %v1304 = vmul.f32 %v1210, 0.35355338
        %v1305 = vmul.f32 %v1215, 0.35355338
        %v1306 = vmul.f32 %v1218, 0.35355338
        %v1307 = vmul.f32 %v1223, 0.35355338
        %v1308 = vmul.f32 %v1226, 0.35355338
        %v1309 = vmul.f32 %v1231, 0.35355338
        %v1310 = vmul.f32 %v1234, 0.35355338
        %v1311 = vmul.f32 %v1239, 0.35355338
        %v1312 = vmul.f32 %v1242, 0.35355338
        %v1313 = vmul.f32 %v1247, 0.35355338
        %v1314 = vmul.f32 %v1250, 0.35355338
        %v1315 = vmul.f32 %v1255, 0.35355338
        %v1316 = vmul.f32 %v1258, 0.35355338
        %v1317 = vmul.f32 %v1263, 0.35355338
        %v1318 = vmul.f32 %v1266, 0.35355338
        %v1319 = vmul.f32 %v1271, 0.35355338
        %v1320 = vmul.f32 %v1274, 0.35355338
        %v1321 = vmul.f32 %v1279, 0.35355338
        %v1322 = vmul.f32 %v1282, 0.35355338
        %v1323 = vmul.f32 %v1287, 0.35355338
        %v1324 = vmul.f32 %v1290, 0.35355338
        %v1325 = vpack.c.bf16 %v1294, %v1293
        %v1326 = vpack.c.bf16 %v1296, %v1295
        %v1327 = vpack.c.bf16 %v1298, %v1297
        %v1328 = vpack.c.bf16 %v1300, %v1299
        %v1329 = vpack.c.bf16 %v1302, %v1301
        %v1330 = vpack.c.bf16 %v1304, %v1303
        %v1331 = vpack.c.bf16 %v1306, %v1305
        %v1332 = vpack.c.bf16 %v1308, %v1307
        %v1333 = vpack.c.bf16 %v1310, %v1309
        %v1334 = vpack.c.bf16 %v1312, %v1311
        %v1335 = vpack.c.bf16 %v1314, %v1313
        %v1336 = vpack.c.bf16 %v1316, %v1315
        %v1337 = vpack.c.bf16 %v1318, %v1317
        %v1338 = vpack.c.bf16 %v1320, %v1319
        %v1339 = vpack.c.bf16 %v1322, %v1321
        %v1340 = vpack.c.bf16 %v1324, %v1323
        %v1357 = vunpack.c.l.b16 %v1325
        %v1358 = vunpack.c.h.b16 %v1325
        %v1359 = vunpack.c.l.b16 %v1326
        %v1360 = vunpack.c.h.b16 %v1326
        %v1361 = vunpack.c.l.b16 %v1327
        %v1362 = vunpack.c.h.b16 %v1327
        %v1363 = vunpack.c.l.b16 %v1328
        %v1364 = vunpack.c.h.b16 %v1328
        %v1365 = vunpack.c.l.b16 %v1329
        %v1366 = vunpack.c.h.b16 %v1329
        %v1367 = vunpack.c.l.b16 %v1330
        %v1368 = vunpack.c.h.b16 %v1330
        %v1369 = vunpack.c.l.b16 %v1331
        %v1370 = vunpack.c.h.b16 %v1331
        %v1371 = vunpack.c.l.b16 %v1332
        %v1372 = vunpack.c.h.b16 %v1332
        %v1373 = vunpack.c.l.b16 %v1333
        %v1374 = vunpack.c.h.b16 %v1333
        %v1375 = vunpack.c.l.b16 %v1334
        %v1376 = vunpack.c.h.b16 %v1334
        %v1377 = vunpack.c.l.b16 %v1335
        %v1378 = vunpack.c.h.b16 %v1335
        %v1379 = vunpack.c.l.b16 %v1336
        %v1380 = vunpack.c.h.b16 %v1336
        %v1381 = vunpack.c.l.b16 %v1337
        %v1382 = vunpack.c.h.b16 %v1337
        %v1383 = vunpack.c.l.b16 %v1338
        %v1384 = vunpack.c.h.b16 %v1338
        %v1385 = vunpack.c.l.b16 %v1339
        %v1386 = vunpack.c.h.b16 %v1339
        %v1387 = vunpack.c.l.b16 %v1340
        %v1388 = vunpack.c.h.b16 %v1340
        %v1389 = vpack.c.b16 %v1357, %v1357
        %v1390 = vpack.c.b16 %v1358, %v1358
        %v1391 = vpack.c.b16 %v1359, %v1359
        %v1392 = vpack.c.b16 %v1360, %v1360
        %v1393 = vpack.c.b16 %v1361, %v1361
        %v1394 = vpack.c.b16 %v1362, %v1362
        %v1395 = vpack.c.b16 %v1363, %v1363
        %v1396 = vpack.c.b16 %v1364, %v1364
        %v1397 = vpack.c.b16 %v1365, %v1365
        %v1398 = vpack.c.b16 %v1366, %v1366
        %v1399 = vpack.c.b16 %v1367, %v1367
        %v1400 = vpack.c.b16 %v1368, %v1368
        %v1401 = vpack.c.b16 %v1369, %v1369
        %v1402 = vpack.c.b16 %v1370, %v1370
        %v1403 = vpack.c.b16 %v1371, %v1371
        %v1404 = vpack.c.b16 %v1372, %v1372
        %v1405 = vpack.c.b16 %v1373, %v1373
        %v1406 = vpack.c.b16 %v1374, %v1374
        %v1407 = vpack.c.b16 %v1375, %v1375
        %v1408 = vpack.c.b16 %v1376, %v1376
        %v1409 = vpack.c.b16 %v1377, %v1377
        %v1410 = vpack.c.b16 %v1378, %v1378
        %v1411 = vpack.c.b16 %v1379, %v1379
        %v1412 = vpack.c.b16 %v1380, %v1380
        %v1413 = vpack.c.b16 %v1381, %v1381
        %v1414 = vpack.c.b16 %v1382, %v1382
        %v1415 = vpack.c.b16 %v1383, %v1383
        %v1416 = vpack.c.b16 %v1384, %v1384
        %v1417 = vpack.c.b16 %v1385, %v1385
        %v1418 = vpack.c.b16 %v1386, %v1386
        %v1419 = vpack.c.b16 %v1387, %v1387
        %v1420 = vpack.c.b16 %v1388, %v1388
        %vm1453 = vcmask 60416
        %1454 = vst.msk [vmem:[%s390] sm:$0xf] %vm1453, %v1389
        %1455 = vst.msk [vmem:[%s390 + $0x4] sm:$0xf] %vm1453, %v1390
        %1456 = vst.msk [vmem:[%s390 + $0x8] sm:$0xf] %vm1453, %v1391
        %1457 = vst.msk [vmem:[%s390 + $0xc] sm:$0xf] %vm1453, %v1392
        %1458 = vst.msk [vmem:[%s390 + $0x10] sm:$0xf] %vm1453, %v1393
        %1459 = vst.msk [vmem:[%s390 + $0x14] sm:$0xf] %vm1453, %v1394
        %1460 = vst.msk [vmem:[%s390 + $0x18] sm:$0xf] %vm1453, %v1395
        %1461 = vst.msk [vmem:[%s390 + $0x1c] sm:$0xf] %vm1453, %v1396
        %1462 = vst.msk [vmem:[%s390 + $0x20] sm:$0xf] %vm1453, %v1397
        %1463 = vst.msk [vmem:[%s390 + $0x24] sm:$0xf] %vm1453, %v1398
        %1464 = vst.msk [vmem:[%s390 + $0x28] sm:$0xf] %vm1453, %v1399
        %1465 = vst.msk [vmem:[%s390 + $0x2c] sm:$0xf] %vm1453, %v1400
        %1466 = vst.msk [vmem:[%s390 + $0x30] sm:$0xf] %vm1453, %v1401
        %1467 = vst.msk [vmem:[%s390 + $0x34] sm:$0xf] %vm1453, %v1402
        %1468 = vst.msk [vmem:[%s390 + $0x38] sm:$0xf] %vm1453, %v1403
        %1469 = vst.msk [vmem:[%s390 + $0x3c] sm:$0xf] %vm1453, %v1404
        %1470 = vst.msk [vmem:[%s390 + $0x40] sm:$0xf] %vm1453, %v1405
        %1471 = vst.msk [vmem:[%s390 + $0x44] sm:$0xf] %vm1453, %v1406
        %1472 = vst.msk [vmem:[%s390 + $0x48] sm:$0xf] %vm1453, %v1407
        %1473 = vst.msk [vmem:[%s390 + $0x4c] sm:$0xf] %vm1453, %v1408
        %1474 = vst.msk [vmem:[%s390 + $0x50] sm:$0xf] %vm1453, %v1409
        %1475 = vst.msk [vmem:[%s390 + $0x54] sm:$0xf] %vm1453, %v1410
        %1476 = vst.msk [vmem:[%s390 + $0x58] sm:$0xf] %vm1453, %v1411
        %1477 = vst.msk [vmem:[%s390 + $0x5c] sm:$0xf] %vm1453, %v1412
        %1478 = vst.msk [vmem:[%s390 + $0x60] sm:$0xf] %vm1453, %v1413
        %1479 = vst.msk [vmem:[%s390 + $0x64] sm:$0xf] %vm1453, %v1414
        %1480 = vst.msk [vmem:[%s390 + $0x68] sm:$0xf] %vm1453, %v1415
        %1481 = vst.msk [vmem:[%s390 + $0x6c] sm:$0xf] %vm1453, %v1416
        %1482 = vst.msk [vmem:[%s390 + $0x70] sm:$0xf] %vm1453, %v1417
        %1483 = vst.msk [vmem:[%s390 + $0x74] sm:$0xf] %vm1453, %v1418
        %1484 = vst.msk [vmem:[%s390 + $0x78] sm:$0xf] %vm1453, %v1419
        %1485 = vst.msk [vmem:[%s390 + $0x7c] sm:$0xf] %vm1453, %v1420
        %v1486 = vpack.c.bf16 %v1170, %v1167
        %v1487 = vpack.c.bf16 %v1178, %v1175
        %v1488 = vpack.c.bf16 %v1186, %v1183
        %v1489 = vpack.c.bf16 %v1194, %v1191
        %v1490 = vpack.c.bf16 %v1202, %v1199
        %v1491 = vpack.c.bf16 %v1210, %v1207
        %v1492 = vpack.c.bf16 %v1218, %v1215
        %v1493 = vpack.c.bf16 %v1226, %v1223
        %v1494 = vpack.c.bf16 %v1234, %v1231
        %v1495 = vpack.c.bf16 %v1242, %v1239
        %v1496 = vpack.c.bf16 %v1250, %v1247
        %v1497 = vpack.c.bf16 %v1258, %v1255
        %v1498 = vpack.c.bf16 %v1266, %v1263
        %v1499 = vpack.c.bf16 %v1274, %v1271
        %v1500 = vpack.c.bf16 %v1282, %v1279
        %v1501 = vpack.c.bf16 %v1290, %v1287
        %v1518 = vunpack.c.l.b16 %v1486
        %v1519 = vunpack.c.h.b16 %v1486
        %v1520 = vunpack.c.l.b16 %v1487
        %v1521 = vunpack.c.h.b16 %v1487
        %v1522 = vunpack.c.l.b16 %v1488
        %v1523 = vunpack.c.h.b16 %v1488
        %v1524 = vunpack.c.l.b16 %v1489
        %v1525 = vunpack.c.h.b16 %v1489
        %v1526 = vunpack.c.l.b16 %v1490
        %v1527 = vunpack.c.h.b16 %v1490
        %v1528 = vunpack.c.l.b16 %v1491
        %v1529 = vunpack.c.h.b16 %v1491
        %v1530 = vunpack.c.l.b16 %v1492
        %v1531 = vunpack.c.h.b16 %v1492
        %v1532 = vunpack.c.l.b16 %v1493
        %v1533 = vunpack.c.h.b16 %v1493
        %v1534 = vunpack.c.l.b16 %v1494
        %v1535 = vunpack.c.h.b16 %v1494
        %v1536 = vunpack.c.l.b16 %v1495
        %v1537 = vunpack.c.h.b16 %v1495
        %v1538 = vunpack.c.l.b16 %v1496
        %v1539 = vunpack.c.h.b16 %v1496
        %v1540 = vunpack.c.l.b16 %v1497
        %v1541 = vunpack.c.h.b16 %v1497
        %v1542 = vunpack.c.l.b16 %v1498
        %v1543 = vunpack.c.h.b16 %v1498
        %v1544 = vunpack.c.l.b16 %v1499
        %v1545 = vunpack.c.h.b16 %v1499
        %v1546 = vunpack.c.l.b16 %v1500
        %v1547 = vunpack.c.h.b16 %v1500
        %v1548 = vunpack.c.l.b16 %v1501
        %v1549 = vunpack.c.h.b16 %v1501
        %v1550 = vpack.c.b16 %v1518, %v1518
        %v1551 = vpack.c.b16 %v1519, %v1519
        %v1552 = vpack.c.b16 %v1520, %v1520
        %v1553 = vpack.c.b16 %v1521, %v1521
        %v1554 = vpack.c.b16 %v1522, %v1522
        %v1555 = vpack.c.b16 %v1523, %v1523
        %v1556 = vpack.c.b16 %v1524, %v1524
        %v1557 = vpack.c.b16 %v1525, %v1525
        %v1558 = vpack.c.b16 %v1526, %v1526
        %v1559 = vpack.c.b16 %v1527, %v1527
        %v1560 = vpack.c.b16 %v1528, %v1528
        %v1561 = vpack.c.b16 %v1529, %v1529
        %v1562 = vpack.c.b16 %v1530, %v1530
        %v1563 = vpack.c.b16 %v1531, %v1531
        %v1564 = vpack.c.b16 %v1532, %v1532
        %v1565 = vpack.c.b16 %v1533, %v1533
        %v1566 = vpack.c.b16 %v1534, %v1534
        %v1567 = vpack.c.b16 %v1535, %v1535
        %v1568 = vpack.c.b16 %v1536, %v1536
        %v1569 = vpack.c.b16 %v1537, %v1537
        %v1570 = vpack.c.b16 %v1538, %v1538
        %v1571 = vpack.c.b16 %v1539, %v1539
        %v1572 = vpack.c.b16 %v1540, %v1540
        %v1573 = vpack.c.b16 %v1541, %v1541
        %v1574 = vpack.c.b16 %v1542, %v1542
        %v1575 = vpack.c.b16 %v1543, %v1543
        %v1576 = vpack.c.b16 %v1544, %v1544
        %v1577 = vpack.c.b16 %v1545, %v1545
        %v1578 = vpack.c.b16 %v1546, %v1546
        %v1579 = vpack.c.b16 %v1547, %v1547
        %v1580 = vpack.c.b16 %v1548, %v1548
        %v1581 = vpack.c.b16 %v1549, %v1549
        %1582 = vrot.lane.b32.xlu0 %v1550, 120
        %v1583 = vpop.permute.xlu0 %1582
        %1584 = vrot.lane.b32.xlu0 %v1551, 120
        %v1585 = vpop.permute.xlu0 %1584
        %1586 = vrot.lane.b32.xlu0 %v1552, 120
        %v1587 = vpop.permute.xlu0 %1586
        %1588 = vrot.lane.b32.xlu0 %v1553, 120
        %v1589 = vpop.permute.xlu0 %1588
        %1590 = vrot.lane.b32.xlu0 %v1554, 120
        %v1591 = vpop.permute.xlu0 %1590
        %1592 = vrot.lane.b32.xlu0 %v1555, 120
        %v1593 = vpop.permute.xlu0 %1592
        %1594 = vrot.lane.b32.xlu0 %v1556, 120
        %v1595 = vpop.permute.xlu0 %1594
        %1596 = vrot.lane.b32.xlu0 %v1557, 120
        %v1597 = vpop.permute.xlu0 %1596
        %1598 = vrot.lane.b32.xlu0 %v1558, 120
        %v1599 = vpop.permute.xlu0 %1598
        %1600 = vrot.lane.b32.xlu0 %v1559, 120
        %v1601 = vpop.permute.xlu0 %1600
        %1602 = vrot.lane.b32.xlu0 %v1560, 120
        %v1603 = vpop.permute.xlu0 %1602
        %1604 = vrot.lane.b32.xlu0 %v1561, 120
        %v1605 = vpop.permute.xlu0 %1604
        %1606 = vrot.lane.b32.xlu0 %v1562, 120
        %v1607 = vpop.permute.xlu0 %1606
        %1608 = vrot.lane.b32.xlu0 %v1563, 120
        %v1609 = vpop.permute.xlu0 %1608
        %1610 = vrot.lane.b32.xlu0 %v1564, 120
        %v1611 = vpop.permute.xlu0 %1610
        %1612 = vrot.lane.b32.xlu0 %v1565, 120
        %v1613 = vpop.permute.xlu0 %1612
        %1614 = vrot.lane.b32.xlu0 %v1566, 120
        %v1615 = vpop.permute.xlu0 %1614
        %1616 = vrot.lane.b32.xlu0 %v1567, 120
        %v1617 = vpop.permute.xlu0 %1616
        %1618 = vrot.lane.b32.xlu0 %v1568, 120
        %v1619 = vpop.permute.xlu0 %1618
        %1620 = vrot.lane.b32.xlu0 %v1569, 120
        %v1621 = vpop.permute.xlu0 %1620
        %1622 = vrot.lane.b32.xlu0 %v1570, 120
        %v1623 = vpop.permute.xlu0 %1622
        %1624 = vrot.lane.b32.xlu0 %v1571, 120
        %v1625 = vpop.permute.xlu0 %1624
        %1626 = vrot.lane.b32.xlu0 %v1572, 120
        %v1627 = vpop.permute.xlu0 %1626
        %1628 = vrot.lane.b32.xlu0 %v1573, 120
        %v1629 = vpop.permute.xlu0 %1628
        %1630 = vrot.lane.b32.xlu0 %v1574, 120
        %v1631 = vpop.permute.xlu0 %1630
        %1632 = vrot.lane.b32.xlu0 %v1575, 120
        %v1633 = vpop.permute.xlu0 %1632
        %1634 = vrot.lane.b32.xlu0 %v1576, 120
        %v1635 = vpop.permute.xlu0 %1634
        %1636 = vrot.lane.b32.xlu0 %v1577, 120
        %v1637 = vpop.permute.xlu0 %1636
        %1638 = vrot.lane.b32.xlu0 %v1578, 120
        %v1639 = vpop.permute.xlu0 %1638
        %1640 = vrot.lane.b32.xlu0 %v1579, 120
        %v1641 = vpop.permute.xlu0 %1640
        %1642 = vrot.lane.b32.xlu0 %v1580, 120
        %v1643 = vpop.permute.xlu0 %1642
        %1644 = vrot.lane.b32.xlu0 %v1581, 120
        %v1645 = vpop.permute.xlu0 %1644
        %1678 = vst.msk [vmem:[%s397] sm:$0xf] %vm1453, %v1583
        %1679 = vst.msk [vmem:[%s397 + $0x4] sm:$0xf] %vm1453, %v1585
        %1680 = vst.msk [vmem:[%s397 + $0x8] sm:$0xf] %vm1453, %v1587
        %1681 = vst.msk [vmem:[%s397 + $0xc] sm:$0xf] %vm1453, %v1589
        %1682 = vst.msk [vmem:[%s397 + $0x10] sm:$0xf] %vm1453, %v1591
        %1683 = vst.msk [vmem:[%s397 + $0x14] sm:$0xf] %vm1453, %v1593
        %1684 = vst.msk [vmem:[%s397 + $0x18] sm:$0xf] %vm1453, %v1595
        %1685 = vst.msk [vmem:[%s397 + $0x1c] sm:$0xf] %vm1453, %v1597
        %1686 = vst.msk [vmem:[%s397 + $0x20] sm:$0xf] %vm1453, %v1599
        %1687 = vst.msk [vmem:[%s397 + $0x24] sm:$0xf] %vm1453, %v1601
        %1688 = vst.msk [vmem:[%s397 + $0x28] sm:$0xf] %vm1453, %v1603
        %1689 = vst.msk [vmem:[%s397 + $0x2c] sm:$0xf] %vm1453, %v1605
        %1690 = vst.msk [vmem:[%s397 + $0x30] sm:$0xf] %vm1453, %v1607
        %1691 = vst.msk [vmem:[%s397 + $0x34] sm:$0xf] %vm1453, %v1609
        %1692 = vst.msk [vmem:[%s397 + $0x38] sm:$0xf] %vm1453, %v1611
        %1693 = vst.msk [vmem:[%s397 + $0x3c] sm:$0xf] %vm1453, %v1613
        %1694 = vst.msk [vmem:[%s397 + $0x40] sm:$0xf] %vm1453, %v1615
        %1695 = vst.msk [vmem:[%s397 + $0x44] sm:$0xf] %vm1453, %v1617
        %1696 = vst.msk [vmem:[%s397 + $0x48] sm:$0xf] %vm1453, %v1619
        %1697 = vst.msk [vmem:[%s397 + $0x4c] sm:$0xf] %vm1453, %v1621
        %1698 = vst.msk [vmem:[%s397 + $0x50] sm:$0xf] %vm1453, %v1623
        %1699 = vst.msk [vmem:[%s397 + $0x54] sm:$0xf] %vm1453, %v1625
        %1700 = vst.msk [vmem:[%s397 + $0x58] sm:$0xf] %vm1453, %v1627
        %1701 = vst.msk [vmem:[%s397 + $0x5c] sm:$0xf] %vm1453, %v1629
        %1702 = vst.msk [vmem:[%s397 + $0x60] sm:$0xf] %vm1453, %v1631
        %1703 = vst.msk [vmem:[%s397 + $0x64] sm:$0xf] %vm1453, %v1633
        %1704 = vst.msk [vmem:[%s397 + $0x68] sm:$0xf] %vm1453, %v1635
        %1705 = vst.msk [vmem:[%s397 + $0x6c] sm:$0xf] %vm1453, %v1637
        %1706 = vst.msk [vmem:[%s397 + $0x70] sm:$0xf] %vm1453, %v1639
        %1707 = vst.msk [vmem:[%s397 + $0x74] sm:$0xf] %vm1453, %v1641
        %1708 = vst.msk [vmem:[%s397 + $0x78] sm:$0xf] %vm1453, %v1643
        %1709 = vst.msk [vmem:[%s397 + $0x7c] sm:$0xf] %vm1453, %v1645
        %1710 = vrot.lane.b32.xlu0 %v1550, 112
        %v1711 = vpop.permute.xlu0 %1710
        %1712 = vrot.lane.b32.xlu0 %v1551, 112
        %v1713 = vpop.permute.xlu0 %1712
        %1714 = vrot.lane.b32.xlu0 %v1552, 112
        %v1715 = vpop.permute.xlu0 %1714
        %1716 = vrot.lane.b32.xlu0 %v1553, 112
        %v1717 = vpop.permute.xlu0 %1716
        %1718 = vrot.lane.b32.xlu0 %v1554, 112
        %v1719 = vpop.permute.xlu0 %1718
        %1720 = vrot.lane.b32.xlu0 %v1555, 112
        %v1721 = vpop.permute.xlu0 %1720
        %1722 = vrot.lane.b32.xlu0 %v1556, 112
        %v1723 = vpop.permute.xlu0 %1722
        %1724 = vrot.lane.b32.xlu0 %v1557, 112
        %v1725 = vpop.permute.xlu0 %1724
        %1726 = vrot.lane.b32.xlu0 %v1558, 112
        %v1727 = vpop.permute.xlu0 %1726
        %1728 = vrot.lane.b32.xlu0 %v1559, 112
        %v1729 = vpop.permute.xlu0 %1728
        %1730 = vrot.lane.b32.xlu0 %v1560, 112
        %v1731 = vpop.permute.xlu0 %1730
        %1732 = vrot.lane.b32.xlu0 %v1561, 112
        %v1733 = vpop.permute.xlu0 %1732
        %1734 = vrot.lane.b32.xlu0 %v1562, 112
        %v1735 = vpop.permute.xlu0 %1734
        %1736 = vrot.lane.b32.xlu0 %v1563, 112
        %v1737 = vpop.permute.xlu0 %1736
        %1738 = vrot.lane.b32.xlu0 %v1564, 112
        %v1739 = vpop.permute.xlu0 %1738
        %1740 = vrot.lane.b32.xlu0 %v1565, 112
        %v1741 = vpop.permute.xlu0 %1740
        %1742 = vrot.lane.b32.xlu0 %v1566, 112
        %v1743 = vpop.permute.xlu0 %1742
        %1744 = vrot.lane.b32.xlu0 %v1567, 112
        %v1745 = vpop.permute.xlu0 %1744
        %1746 = vrot.lane.b32.xlu0 %v1568, 112
        %v1747 = vpop.permute.xlu0 %1746
        %1748 = vrot.lane.b32.xlu0 %v1569, 112
        %v1749 = vpop.permute.xlu0 %1748
        %1750 = vrot.lane.b32.xlu0 %v1570, 112
        %v1751 = vpop.permute.xlu0 %1750
        %1752 = vrot.lane.b32.xlu0 %v1571, 112
        %v1753 = vpop.permute.xlu0 %1752
        %1754 = vrot.lane.b32.xlu0 %v1572, 112
        %v1755 = vpop.permute.xlu0 %1754
        %1756 = vrot.lane.b32.xlu0 %v1573, 112
        %v1757 = vpop.permute.xlu0 %1756
        %1758 = vrot.lane.b32.xlu0 %v1574, 112
        %v1759 = vpop.permute.xlu0 %1758
        %1760 = vrot.lane.b32.xlu0 %v1575, 112
        %v1761 = vpop.permute.xlu0 %1760
        %1762 = vrot.lane.b32.xlu0 %v1576, 112
        %v1763 = vpop.permute.xlu0 %1762
        %1764 = vrot.lane.b32.xlu0 %v1577, 112
        %v1765 = vpop.permute.xlu0 %1764
        %1766 = vrot.lane.b32.xlu0 %v1578, 112
        %v1767 = vpop.permute.xlu0 %1766
        %1768 = vrot.lane.b32.xlu0 %v1579, 112
        %v1769 = vpop.permute.xlu0 %1768
        %1770 = vrot.lane.b32.xlu0 %v1580, 112
        %v1771 = vpop.permute.xlu0 %1770
        %1772 = vrot.lane.b32.xlu0 %v1581, 112
        %v1773 = vpop.permute.xlu0 %1772
        %1806 = vst.msk [vmem:[%s404] sm:$0xf] %vm1453, %v1711
        %1807 = vst.msk [vmem:[%s404 + $0x4] sm:$0xf] %vm1453, %v1713
        %1808 = vst.msk [vmem:[%s404 + $0x8] sm:$0xf] %vm1453, %v1715
        %1809 = vst.msk [vmem:[%s404 + $0xc] sm:$0xf] %vm1453, %v1717
        %1810 = vst.msk [vmem:[%s404 + $0x10] sm:$0xf] %vm1453, %v1719
        %1811 = vst.msk [vmem:[%s404 + $0x14] sm:$0xf] %vm1453, %v1721
        %1812 = vst.msk [vmem:[%s404 + $0x18] sm:$0xf] %vm1453, %v1723
        %1813 = vst.msk [vmem:[%s404 + $0x1c] sm:$0xf] %vm1453, %v1725
        %1814 = vst.msk [vmem:[%s404 + $0x20] sm:$0xf] %vm1453, %v1727
        %1815 = vst.msk [vmem:[%s404 + $0x24] sm:$0xf] %vm1453, %v1729
        %1816 = vst.msk [vmem:[%s404 + $0x28] sm:$0xf] %vm1453, %v1731
        %1817 = vst.msk [vmem:[%s404 + $0x2c] sm:$0xf] %vm1453, %v1733
        %1818 = vst.msk [vmem:[%s404 + $0x30] sm:$0xf] %vm1453, %v1735
        %1819 = vst.msk [vmem:[%s404 + $0x34] sm:$0xf] %vm1453, %v1737
        %1820 = vst.msk [vmem:[%s404 + $0x38] sm:$0xf] %vm1453, %v1739
        %1821 = vst.msk [vmem:[%s404 + $0x3c] sm:$0xf] %vm1453, %v1741
        %1822 = vst.msk [vmem:[%s404 + $0x40] sm:$0xf] %vm1453, %v1743
        %1823 = vst.msk [vmem:[%s404 + $0x44] sm:$0xf] %vm1453, %v1745
        %1824 = vst.msk [vmem:[%s404 + $0x48] sm:$0xf] %vm1453, %v1747
        %1825 = vst.msk [vmem:[%s404 + $0x4c] sm:$0xf] %vm1453, %v1749
        %1826 = vst.msk [vmem:[%s404 + $0x50] sm:$0xf] %vm1453, %v1751
        %1827 = vst.msk [vmem:[%s404 + $0x54] sm:$0xf] %vm1453, %v1753
        %1828 = vst.msk [vmem:[%s404 + $0x58] sm:$0xf] %vm1453, %v1755
        %1829 = vst.msk [vmem:[%s404 + $0x5c] sm:$0xf] %vm1453, %v1757
        %1830 = vst.msk [vmem:[%s404 + $0x60] sm:$0xf] %vm1453, %v1759
        %1831 = vst.msk [vmem:[%s404 + $0x64] sm:$0xf] %vm1453, %v1761
        %1832 = vst.msk [vmem:[%s404 + $0x68] sm:$0xf] %vm1453, %v1763
        %1833 = vst.msk [vmem:[%s404 + $0x6c] sm:$0xf] %vm1453, %v1765
        %1834 = vst.msk [vmem:[%s404 + $0x70] sm:$0xf] %vm1453, %v1767
        %1835 = vst.msk [vmem:[%s404 + $0x74] sm:$0xf] %vm1453, %v1769
        %1836 = vst.msk [vmem:[%s404 + $0x78] sm:$0xf] %vm1453, %v1771
        %1837 = vst.msk [vmem:[%s404 + $0x7c] sm:$0xf] %vm1453, %v1773
        %s1838 = sand.u32 %s171, 1
        %s1839 = scalar_lea.sflag [#allocation4], %s1838
        %s1840 = sand.u32 %s171, 1
        %s1841 = smul.addr %s1840, 128
        %s1842 = scalar_lea.vmem [#allocation13], %s1841
        %s1843 = sand.u32 %s32, 1
        %s1844 = scalar_lea.sflag [#allocation15], %s1843
        %s1845 = sand.u32 %s197, 1
        %s1846 = smul.addr %s1845, 128
        %s1847 = scalar_lea.vmem [#allocation14], %s1846
        %s1848 = sand.u32 %s32, 1
        %s1849 = scalar_lea.sflag [#allocation15], %s1848
        %s1850 = sand.u32 %s223, 1
        %s1851 = smul.addr %s1850, 128
        %s1852 = scalar_lea.vmem [#allocation16], %s1851
        // Predicated region
        $region69: #{tpu_custom_call.1} parent=43 // pred_check
          %p1853 = pneg %p181
        $region70: #{tpu_custom_call.1} parent=43 // pred_check_branch
          %1855 = sbr.rel (%p1853) target = $region72
        $region71: #{tpu_custom_call.1} parent=43 // pred_region
          %s1857 = ssub.s32 2048, 2048
          %1858 = vsyncadd %s1839, %s1857
          %s1859 = smul.addr %s32, 32
          %s1860 = smul.addr %s1859, 64
          %s1861 = scalar_lea.hbm %s6, %s1860
          %s1862 = sshll.u32 %s1842, 4
          %s1863 = int_to_ptr.vmem [resolvable:$true] %s1862
          %1868 = dma.vmem_to_hbm [thread:$0]  %s1863, 2048, %s1861, %s1839, 64, 64, 4
        $region72: #{tpu_custom_call.1} parent=43 // pred_fallthru
          _
        // Predicated region
        $region73: #{tpu_custom_call.1} parent=43 // pred_check
          %p1869 = pneg %p207
        $region74: #{tpu_custom_call.1} parent=43 // pred_check_branch
          %1871 = sbr.rel (%p1869) target = $region76
        $region75: #{tpu_custom_call.1} parent=43 // pred_region
          %s1873 = ssub.s32 2048, 2048
          %1874 = vsyncadd %s1844, %s1873
          %s1875 = smul.addr %s32, 32
          %s1876 = smul.addr %s1875, 64
          %s1877 = scalar_lea.hbm %s7, %s1876
          %s1878 = sshll.u32 %s1847, 4
          %s1879 = int_to_ptr.vmem [resolvable:$true] %s1878
          %1884 = dma.vmem_to_hbm [thread:$0]  %s1879, 2048, %s1877, %s1844, 64, 64, 4
        $region76: #{tpu_custom_call.1} parent=43 // pred_fallthru
          _
        // Predicated region
        $region77: #{tpu_custom_call.1} parent=43 // pred_check
          %p1885 = pneg %p233
        $region78: #{tpu_custom_call.1} parent=43 // pred_check_branch
          %1887 = sbr.rel (%p1885) target = $region80
        $region79: #{tpu_custom_call.1} parent=43 // pred_region
          %s1889 = ssub.s32 2048, 2048
          %1890 = vsyncadd %s1849, %s1889
          %s1891 = smul.addr %s32, 32
          %s1892 = smul.addr %s1891, 64
          %s1893 = scalar_lea.hbm %s8, %s1892
          %s1894 = sshll.u32 %s1852, 4
          %s1895 = int_to_ptr.vmem [resolvable:$true] %s1894
          %1900 = dma.vmem_to_hbm [thread:$0]  %s1895, 2048, %s1893, %s1849, 64, 64, 4
        $region80: #{tpu_custom_call.1} parent=43 // pred_fallthru
          _
      $region44: #{tpu_custom_call.1} parent=5 // pred_fallthru
        _
      %p1901 = scmp.le.s32.totalorder 2, %s27
      // Predicated region
      $region81: #{tpu_custom_call.1} parent=5 // pred_check
        %p1902 = pneg %p1901
      $region82: #{tpu_custom_call.1} parent=5 // pred_check_branch
        %1904 = sbr.rel (%p1902) target = $region84
      $region83: #{tpu_custom_call.1} parent=5 // pred_region
        %s1905 = ssub.s32 %s27, 2
        // Predicated region
        $region85: #{tpu_custom_call.1} parent=83 // pred_check
          %p1906 = pneg %p187
        $region86: #{tpu_custom_call.1} parent=83 // pred_check_branch
          %1908 = sbr.rel (%p1906) target = $region88
        $region87: #{tpu_custom_call.1} parent=83 // pred_region
          %s1909 = sand.u32 %s172, 1
          %s1910 = scalar_lea.sflag [#allocation4], %s1909
          %s1911 = sand.u32 %s172, 1
          %s1912 = smul.addr %s1911, 128
          %s1913 = scalar_lea.vmem [#allocation13], %s1912
          %1914 = dma.done %s1910, 2048
        $region88: #{tpu_custom_call.1} parent=83 // pred_fallthru
          _
        // Predicated region
        $region89: #{tpu_custom_call.1} parent=83 // pred_check
          %p1915 = pneg %p213
        $region90: #{tpu_custom_call.1} parent=83 // pred_check_branch
          %1917 = sbr.rel (%p1915) target = $region92
        $region91: #{tpu_custom_call.1} parent=83 // pred_region
          %s1918 = sand.u32 %s33, 1
          %s1919 = scalar_lea.sflag [#allocation15], %s1918
          %s1920 = sand.u32 %s198, 1
          %s1921 = smul.addr %s1920, 128
          %s1922 = scalar_lea.vmem [#allocation14], %s1921
          %1923 = dma.done %s1919, 2048
        $region92: #{tpu_custom_call.1} parent=83 // pred_fallthru
          _
        // Predicated region
        $region93: #{tpu_custom_call.1} parent=83 // pred_check
          %p1924 = pneg %p239
        $region94: #{tpu_custom_call.1} parent=83 // pred_check_branch
          %1926 = sbr.rel (%p1924) target = $region96
        $region95: #{tpu_custom_call.1} parent=83 // pred_region
          %s1927 = sand.u32 %s33, 1
          %s1928 = scalar_lea.sflag [#allocation15], %s1927
          %s1929 = sand.u32 %s224, 1
          %s1930 = smul.addr %s1929, 128
          %s1931 = scalar_lea.vmem [#allocation16], %s1930
          %1932 = dma.done %s1928, 2048
        $region96: #{tpu_custom_call.1} parent=83 // pred_fallthru
          _
      $region84: #{tpu_custom_call.1} parent=5 // pred_fallthru
        _
    $region6: #{tpu_custom_call.1} parent=1 // loop_footer
      %s31 = sadd.s32 1, %s27
    $region7: #{tpu_custom_call.1} parent=1 // loop_footer_branch
      %26 = sbr.rel target = $region3
    $region8: #{tpu_custom_call.1} parent=1 // loop_exit
      _
    %1933 = vsyncpa [#allocation3], 1
    %s1934 = scalar_lea.sflag [#allocation3], 1
    %1935 = vsyncpa %s1934, 1
    %1936 = vsyncpa [#allocation6], 1
    %1937 = vsyncpa [#allocation9], 1
    %1938 = vsyncpa [#allocation12], 1
    %1939 = vsyncpa [#allocation4], 1
    %s1940 = scalar_lea.sflag [#allocation4], 1
    %1941 = vsyncpa %s1940, 1
    %1942 = vsyncpa [#allocation15], 1
    %s1943 = scalar_lea.sflag [#allocation15], 1
    %1944 = vsyncpa %s1943, 1

</llo_original>
